<compile_context>
chip_gen: v5e
topology: v5e:2x2
jax: 0.10.0
libtpu: 0.0.40
codegen_flags: <defaults>
</compile_context>

<pallas_src>
from functools import partial

import numpy as np
import jax
import jax.numpy as jnp
from jax import lax
from jax.experimental import pallas as pl
from jax.experimental.pallas import tpu as pltpu


def _make_tap_masks(H, W):
    """(9, H*W) float32 validity masks for the 9 taps of a SAME 3x3 conv."""
    hh, ww = np.meshgrid(np.arange(H), np.arange(W), indexing="ij")
    masks = []
    for kh in range(3):
        for kw in range(3):
            dh, dw = kh - 1, kw - 1
            valid = ((hh + dh >= 0) & (hh + dh < H) &
                     (ww + dw >= 0) & (ww + dw < W))
            masks.append(valid.reshape(-1))
    return jnp.asarray(np.stack(masks).astype(np.float32))


def _mt_kernel(x_ref, p_ref, mask_ref, w1_ref, b2_ref, w4_ref, o_ref, stk_ref,
               *, H, W, C):
    HW = H * W
    C2 = 2 * C
    x = x_ref[0].astype(jnp.float32)          # (C, HW)
    p = p_ref[0].astype(jnp.float32)          # (C, HW)

    # ---------- Matching: nearest perception channel per x channel ----------
    # argmin_j ||x_i - p_j||^2 == argmin_j (||p_j||^2 - 2 <x_i, p_j>)
    g = lax.dot_general(x, p, (((1,), (1,)), ((), ())),
                        precision=lax.Precision.HIGHEST,
                        preferred_element_type=jnp.float32)             # (C, C)
    pn = lax.dot_general(jnp.ones((1, HW), jnp.float32), p * p,
                         (((1,), (1,)), ((), ())),
                         precision=lax.Precision.HIGHEST,
                         preferred_element_type=jnp.float32)            # (1, C)
    score = pn - 2.0 * g                                                # (C, C)
    smin = jnp.min(score, axis=1, keepdims=True)                        # (C, 1)
    col = lax.broadcasted_iota(jnp.int32, (C, C), 1).astype(jnp.float32)
    cand = jnp.where(score <= smin, col, jnp.float32(C))                # first-min
    nn = jnp.min(cand, axis=1, keepdims=True)                           # (C, 1)
    onehot = (col == nn).astype(jnp.float32)                            # (C, C)
    # Gather of the matched perception channels as a one-hot matmul (MXU).
    filtered = jnp.dot(onehot, p, preferred_element_type=jnp.float32)   # (C, HW)

    masks = mask_ref[...]                                               # (9, HW)

    # ------- Stack 1: 9 rolled+masked taps of [x ; filtered] (no concat) -----
    for kh in range(3):
        for kw in range(3):
            t = kh * 3 + kw
            off = (kh - 1) * W + (kw - 1)
            r0 = t * C2
            if off == 0:                       # center tap: no roll, mask == 1
                stk_ref[r0:r0 + C, :] = x
                stk_ref[r0 + C:r0 + C2, :] = filtered
            else:
                sh = (-off) % HW               # shifted[:,k] = inp[:,(k+off)%HW]
                m = masks[t:t + 1, :]
                stk_ref[r0:r0 + C, :] = pltpu.roll(x, shift=sh, axis=1) * m
                stk_ref[r0 + C:r0 + C2, :] = (
                    pltpu.roll(filtered, shift=sh, axis=1) * m)

    # ---- Fused k3 (3x3) + k2 (1x1) as ONE matmul over the stacked taps -----
    r1 = jnp.dot(w1_ref[...].astype(jnp.float32), stk_ref[...],
                 preferred_element_type=jnp.float32)                    # (2*C2, HW)
    z = r1[:C2, :]                                                      # k3(cat)
    t2 = r1[C2:, :] + b2_ref[...].astype(jnp.float32)                   # k2(cat)
    y = 0.5 * jnp.tanh(0.5 * t2) + 0.5          # sigmoid via EUP tanh (exact)
    gxy = z * y                                                         # (C2, HW)

    # ---------------- Stack 2: 9 rolled+masked taps of z*y ------------------
    for kh in range(3):
        for kw in range(3):
            t = kh * 3 + kw
            off = (kh - 1) * W + (kw - 1)
            r0 = t * C2
            if off == 0:
                stk_ref[r0:r0 + C2, :] = gxy
            else:
                sh = (-off) % HW
                stk_ref[r0:r0 + C2, :] = (
                    pltpu.roll(gxy, shift=sh, axis=1) * masks[t:t + 1, :])

    # --------------------------- k4 (3x3, 2C->C) ----------------------------
    out = jnp.dot(w4_ref[...].astype(jnp.float32), stk_ref[...],
                  preferred_element_type=jnp.float32)                   # (C, HW)
    o_ref[0] = out.astype(o_ref.dtype)


def matching_transformation(x, perception, w2, b2, w3, w4):
    """Forward of Matching_transformation (match_factor == 1).

    x, perception: (B, C, H, W); w2: (2C, 2C, 1, 1); b2: (2C,);
    w3: (2C, 2C, 3, 3); w4: (C, 2C, 3, 3).  Returns (B, C, H, W).
    """
    B, C, H, W = x.shape
    assert perception.shape == x.shape
    C2 = 2 * C
    assert w2.shape == (C2, C2, 1, 1) and b2.shape == (C2,)
    assert w3.shape == (C2, C2, 3, 3) and w4.shape == (C, C2, 3, 3)
    HW = H * W
    K = 9 * C2

    # Activations: free reshapes only (no transposes / pads).
    x3 = x.reshape(B, C, HW)
    p3 = perception.reshape(B, C, HW)

    # Weight prep (tiny tensors, done host-side once):
    #   stacked column layout: col = t*C2 + cin, with tap t = kh*3 + kw.
    w3s = jnp.transpose(w3, (0, 2, 3, 1)).reshape(C2, K)                # k3
    w2s = jnp.zeros((C2, K), w2.dtype).at[:, 4 * C2:5 * C2].set(
        w2.reshape(C2, C2))                                             # k2 @ center tap
    w1 = jnp.concatenate([w3s, w2s], axis=0)                            # (2*C2, K)
    w4s = jnp.transpose(w4, (0, 2, 3, 1)).reshape(C, K)                 # k4
    b2b = jnp.broadcast_to(b2.reshape(C2, 1), (C2, HW))                 # lane-dense bias
    tap_mask = _make_tap_masks(H, W)

    kernel = partial(_mt_kernel, H=H, W=W, C=C)
    out3 = pl.pallas_call(
        kernel,
        out_shape=jax.ShapeDtypeStruct((B, C, HW), x.dtype),
        grid_spec=pltpu.PrefetchScalarGridSpec(
            num_scalar_prefetch=0,
            grid=(B,),
            in_specs=[
                pl.BlockSpec((1, C, HW), lambda b: (b, 0, 0)),    # x
                pl.BlockSpec((1, C, HW), lambda b: (b, 0, 0)),    # perception
                pl.BlockSpec((9, HW), lambda b: (0, 0)),          # tap masks (resident)
                pl.BlockSpec((2 * C2, K), lambda b: (0, 0)),      # fused k3+k2 weight
                pl.BlockSpec((C2, HW), lambda b: (0, 0)),         # k2 bias (broadcast)
                pl.BlockSpec((C, K), lambda b: (0, 0)),           # k4 weight
            ],
            out_specs=pl.BlockSpec((1, C, HW), lambda b: (b, 0, 0)),
            scratch_shapes=[pltpu.VMEM((K, HW), jnp.float32)],    # stacked tap slab
        ),
        compiler_params=pltpu.CompilerParams(
            dimension_semantics=("parallel",),
        ),
    )(x3, p3, tap_mask, w1, b2b, w4s)
    return out3.reshape(B, C, H, W)


# ----------------------------- pure-JAX reference -----------------------------
def _conv2d_ref(x, w, b=None):
    kh, kw = w.shape[2], w.shape[3]
    out = lax.conv_general_dilated(
        x, w, window_strides=(1, 1),
        padding=[(kh // 2, kh // 2), (kw // 2, kw // 2)],
        dimension_numbers=("NCHW", "OIHW", "NCHW"),
        precision=lax.Precision.HIGHEST)
    if b is not None:
        out = out + b.reshape(1, -1, 1, 1)
    return out


def matching_transformation_ref(x, perception, w2, b2, w3, w4):
    B, C, H, W = x.shape
    HW = H * W
    xf = x.reshape(B, C, HW)
    pf = perception.reshape(B, C, HW)
    d2 = (jnp.sum(xf * xf, axis=-1)[:, :, None]
          + jnp.sum(pf * pf, axis=-1)[:, None, :]
          - 2.0 * jnp.einsum("bid,bjd->bij", xf, pf,
                             precision=lax.Precision.HIGHEST))
    idx = jnp.argmin(d2, axis=-1)                                  # (B, C)
    filtered = jnp.take_along_axis(pf, idx[:, :, None], axis=1)    # (B, C, HW)
    cat = jnp.concatenate([xf, filtered], axis=1).reshape(B, 2 * C, H, W)
    y = jax.nn.sigmoid(_conv2d_ref(cat, w2, b2))
    z = _conv2d_ref(cat, w3)
    return _conv2d_ref(z * y, w4)


if __name__ == "__main__":
    key = jax.random.PRNGKey(0)
    B, C, H, W = 2, 4, 16, 16          # dim=4, match_factor=1 -> num_matching=4
    C2 = 2 * C
    kx, kp, kw2, kb2, kw3, kw4 = jax.random.split(key, 6)
    x = jax.random.normal(kx, (B, C, H, W), dtype=jnp.float32)
    perception = jax.random.normal(kp, (B, C, H, W), dtype=jnp.float32)
    # Deterministic stand-ins for PAConv's conv parameters.
    w2 = 0.2 * jax.random.normal(kw2, (C2, C2, 1, 1), dtype=jnp.float32)
    b2 = 0.1 * jax.random.normal(kb2, (C2,), dtype=jnp.float32)
    w3 = 0.1 * jax.random.normal(kw3, (C2, C2, 3, 3), dtype=jnp.float32)
    w4 = 0.1 * jax.random.normal(kw4, (C, C2, 3, 3), dtype=jnp.float32)

    out = matching_transformation(x, perception, w2, b2, w3, w4)
    out = jax.block_until_ready(out)

    ref = matching_transformation_ref(x, perception, w2, b2, w3, w4)
    assert out.shape == (B, C, H, W)
    err = float(jnp.max(jnp.abs(out - ref)))
    assert jnp.allclose(out, ref, atol=1e-3, rtol=1e-3), f"max |err| = {err}"

    print("KERNEL_OK")
</pallas_src>

<mosaic_0001>
module attributes {stable_mosaic.version = 11 : i64} {
  func.func @_mt_kernel(%arg0: i32, %arg1: memref<1x4x256xf32, #tpu.memory_space<vmem>>, %arg2: memref<1x4x256xf32, #tpu.memory_space<vmem>>, %arg3: memref<9x256xf32, #tpu.memory_space<vmem>>, %arg4: memref<16x72xf32, #tpu.memory_space<vmem>>, %arg5: memref<8x256xf32, #tpu.memory_space<vmem>>, %arg6: memref<4x72xf32, #tpu.memory_space<vmem>>, %arg7: memref<1x4x256xf32, #tpu.memory_space<vmem>>, %arg8: memref<72x256xf32, #tpu.memory_space<vmem>>) attributes {dimension_semantics = [#tpu.dimension_semantics<parallel>], iteration_bounds = array<i64: 2>, scalar_prefetch = 0 : i64, scratch_operands = 1 : i64, tpu.core_type = #tpu.core_type<tc>, window_params = [{transform_indices = @transform_0, window_bounds = array<i64: 1, 4, 256>}, {transform_indices = @transform_1, window_bounds = array<i64: 1, 4, 256>}, {pipeline_mode = #tpu.pipeline_mode<synchronous>, transform_indices = @transform_2, window_bounds = array<i64: 9, 256>}, {pipeline_mode = #tpu.pipeline_mode<synchronous>, transform_indices = @transform_3, window_bounds = array<i64: 16, 72>}, {pipeline_mode = #tpu.pipeline_mode<synchronous>, transform_indices = @transform_4, window_bounds = array<i64: 8, 256>}, {pipeline_mode = #tpu.pipeline_mode<synchronous>, transform_indices = @transform_5, window_bounds = array<i64: 4, 72>}, {transform_indices = @transform_6, window_bounds = array<i64: 1, 4, 256>}]} {
    %c0 = arith.constant 0 : index
    %c0_0 = arith.constant 0 : index
    %c0_1 = arith.constant 0 : index
    %0 = vector.load %arg1[%c0, %c0_0, %c0_1] : memref<1x4x256xf32, #tpu.memory_space<vmem>>, vector<1x4x256xf32>
    %1 = vector.shape_cast %0 : vector<1x4x256xf32> to vector<4x256xf32>
    %c0_2 = arith.constant 0 : index
    %c0_3 = arith.constant 0 : index
    %c0_4 = arith.constant 0 : index
    %2 = vector.load %arg2[%c0_2, %c0_3, %c0_4] : memref<1x4x256xf32, #tpu.memory_space<vmem>>, vector<1x4x256xf32>
    %3 = vector.shape_cast %2 : vector<1x4x256xf32> to vector<4x256xf32>
    %cst = arith.constant dense<0.000000e+00> : vector<4x4xf32>
    %4 = tpu.matmul %1, %3, %cst {dimension_numbers = #tpu.dot_dimension_numbers<[1], [1], [0], [0], [0, 0, 1, 0], [], []>, precision = #tpu.contract_precision<fp32>} : vector<4x256xf32>, vector<4x256xf32>, vector<4x4xf32> -> vector<4x4xf32>
    %cst_5 = arith.constant 1.000000e+00 : f32
    %5 = vector.broadcast %cst_5 : f32 to vector<1x256xf32>
    %6 = arith.mulf %3, %3 : vector<4x256xf32>
    %cst_6 = arith.constant dense<0.000000e+00> : vector<1x4xf32>
    %7 = tpu.matmul %5, %6, %cst_6 {dimension_numbers = #tpu.dot_dimension_numbers<[1], [1], [0], [0], [0, 0, 1, 0], [], []>, precision = #tpu.contract_precision<fp32>} : vector<1x256xf32>, vector<4x256xf32>, vector<1x4xf32> -> vector<1x4xf32>
    %cst_7 = arith.constant 2.000000e+00 : f32
    %8 = vector.broadcast %cst_7 : f32 to vector<4x4xf32>
    %9 = arith.mulf %8, %4 : vector<4x4xf32>
    %10 = vector.broadcast %7 : vector<1x4xf32> to vector<4x4xf32>
    %11 = arith.subf %10, %9 : vector<4x4xf32>
    %cst_8 = arith.constant dense<0x7F800000> : vector<4xf32>
    %12 = vector.multi_reduction <minimumf>, %11, %cst_8 [1] : vector<4x4xf32> to vector<4xf32>
    %13 = vector.shape_cast %12 : vector<4xf32> to vector<4x1xf32>
    %14 = tpu.iota {dimensions = array<i32: 1>} : vector<4x4xi32>
    %15 = arith.sitofp %14 : vector<4x4xi32> to vector<4x4xf32>
    %16 = vector.broadcast %13 : vector<4x1xf32> to vector<4x4xf32>
    %17 = arith.cmpf ole, %11, %16 : vector<4x4xf32>
    %cst_9 = arith.constant 4.000000e+00 : f32
    %18 = vector.broadcast %cst_9 : f32 to vector<4x4xf32>
    %19 = arith.select %17, %15, %18 : vector<4x4xi1>, vector<4x4xf32>
    %cst_10 = arith.constant dense<0x7F800000> : vector<4xf32>
    %20 = vector.multi_reduction <minimumf>, %19, %cst_10 [1] : vector<4x4xf32> to vector<4xf32>
    %21 = vector.shape_cast %20 : vector<4xf32> to vector<4x1xf32>
    %22 = vector.broadcast %21 : vector<4x1xf32> to vector<4x4xf32>
    %23 = arith.cmpf oeq, %15, %22 : vector<4x4xf32>
    %24 = arith.extui %23 : vector<4x4xi1> to vector<4x4xi32>
    %25 = arith.sitofp %24 : vector<4x4xi32> to vector<4x4xf32>
    %cst_11 = arith.constant dense<0.000000e+00> : vector<4x256xf32>
    %26 = tpu.matmul %25, %3, %cst_11 {dimension_numbers = #tpu.dot_dimension_numbers<[1], [0], [0], [1], [0, 0, 1, 1], [], []>} : vector<4x4xf32>, vector<4x256xf32>, vector<4x256xf32> -> vector<4x256xf32>
    %c0_12 = arith.constant 0 : index
    %c0_13 = arith.constant 0 : index
    %27 = vector.load %arg3[%c0_12, %c0_13] : memref<9x256xf32, #tpu.memory_space<vmem>>, vector<9x256xf32>
    %28 = vector.extract_strided_slice %27 {offsets = [0, 0], sizes = [1, 256], strides = [1, 1]} : vector<9x256xf32> to vector<1x256xf32>
    %c17_i32 = arith.constant 17 : i32
    %29 = tpu.dynamic_rotate %1 by %c17_i32 dim 1 : vector<4x256xf32>, i32 -> vector<4x256xf32>
    %30 = vector.broadcast %28 : vector<1x256xf32> to vector<4x256xf32>
    %31 = arith.mulf %29, %30 : vector<4x256xf32>
    %c0_14 = arith.constant 0 : index
    %c0_15 = arith.constant 0 : index
    %32 = vector.load %arg8[%c0_14, %c0_15] : memref<72x256xf32, #tpu.memory_space<vmem>>, vector<4x256xf32>
    tpu.vector_store %arg8[%c0_14, %c0_15], %31 {strides = array<i32>} : memref<72x256xf32, #tpu.memory_space<vmem>>, vector<4x256xf32>,
    %c17_i32_16 = arith.constant 17 : i32
    %33 = tpu.dynamic_rotate %26 by %c17_i32_16 dim 1 : vector<4x256xf32>, i32 -> vector<4x256xf32>
    %34 = vector.broadcast %28 : vector<1x256xf32> to vector<4x256xf32>
    %35 = arith.mulf %33, %34 : vector<4x256xf32>
    %c4 = arith.constant 4 : index
    %c0_17 = arith.constant 0 : index
    %36 = vector.load %arg8[%c4, %c0_17] : memref<72x256xf32, #tpu.memory_space<vmem>>, vector<4x256xf32>
    tpu.vector_store %arg8[%c4, %c0_17], %35 {strides = array<i32>} : memref<72x256xf32, #tpu.memory_space<vmem>>, vector<4x256xf32>,
    %37 = vector.extract_strided_slice %27 {offsets = [1, 0], sizes = [1, 256], strides = [1, 1]} : vector<9x256xf32> to vector<1x256xf32>
    %c16_i32 = arith.constant 16 : i32
    %38 = tpu.dynamic_rotate %1 by %c16_i32 dim 1 : vector<4x256xf32>, i32 -> vector<4x256xf32>
    %39 = vector.broadcast %37 : vector<1x256xf32> to vector<4x256xf32>
    %40 = arith.mulf %38, %39 : vector<4x256xf32>
    %c8 = arith.constant 8 : index
    %c0_18 = arith.constant 0 : index
    %41 = vector.load %arg8[%c8, %c0_18] : memref<72x256xf32, #tpu.memory_space<vmem>>, vector<4x256xf32>
    tpu.vector_store %arg8[%c8, %c0_18], %40 {strides = array<i32>} : memref<72x256xf32, #tpu.memory_space<vmem>>, vector<4x256xf32>,
    %c16_i32_19 = arith.constant 16 : i32
    %42 = tpu.dynamic_rotate %26 by %c16_i32_19 dim 1 : vector<4x256xf32>, i32 -> vector<4x256xf32>
    %43 = vector.broadcast %37 : vector<1x256xf32> to vector<4x256xf32>
    %44 = arith.mulf %42, %43 : vector<4x256xf32>
    %c12 = arith.constant 12 : index
    %c0_20 = arith.constant 0 : index
    %45 = vector.load %arg8[%c12, %c0_20] : memref<72x256xf32, #tpu.memory_space<vmem>>, vector<4x256xf32>
    tpu.vector_store %arg8[%c12, %c0_20], %44 {strides = array<i32>} : memref<72x256xf32, #tpu.memory_space<vmem>>, vector<4x256xf32>,
    %46 = vector.extract_strided_slice %27 {offsets = [2, 0], sizes = [1, 256], strides = [1, 1]} : vector<9x256xf32> to vector<1x256xf32>
    %c15_i32 = arith.constant 15 : i32
    %47 = tpu.dynamic_rotate %1 by %c15_i32 dim 1 : vector<4x256xf32>, i32 -> vector<4x256xf32>
    %48 = vector.broadcast %46 : vector<1x256xf32> to vector<4x256xf32>
    %49 = arith.mulf %47, %48 : vector<4x256xf32>
    %c16 = arith.constant 16 : index
    %c0_21 = arith.constant 0 : index
    %50 = vector.load %arg8[%c16, %c0_21] : memref<72x256xf32, #tpu.memory_space<vmem>>, vector<4x256xf32>
    tpu.vector_store %arg8[%c16, %c0_21], %49 {strides = array<i32>} : memref<72x256xf32, #tpu.memory_space<vmem>>, vector<4x256xf32>,
    %c15_i32_22 = arith.constant 15 : i32
    %51 = tpu.dynamic_rotate %26 by %c15_i32_22 dim 1 : vector<4x256xf32>, i32 -> vector<4x256xf32>
    %52 = vector.broadcast %46 : vector<1x256xf32> to vector<4x256xf32>
    %53 = arith.mulf %51, %52 : vector<4x256xf32>
    %c20 = arith.constant 20 : index
    %c0_23 = arith.constant 0 : index
    %54 = vector.load %arg8[%c20, %c0_23] : memref<72x256xf32, #tpu.memory_space<vmem>>, vector<4x256xf32>
    tpu.vector_store %arg8[%c20, %c0_23], %53 {strides = array<i32>} : memref<72x256xf32, #tpu.memory_space<vmem>>, vector<4x256xf32>,
    %55 = vector.extract_strided_slice %27 {offsets = [3, 0], sizes = [1, 256], strides = [1, 1]} : vector<9x256xf32> to vector<1x256xf32>
    %c1_i32 = arith.constant 1 : i32
    %56 = tpu.dynamic_rotate %1 by %c1_i32 dim 1 : vector<4x256xf32>, i32 -> vector<4x256xf32>
    %57 = vector.broadcast %55 : vector<1x256xf32> to vector<4x256xf32>
    %58 = arith.mulf %56, %57 : vector<4x256xf32>
    %c24 = arith.constant 24 : index
    %c0_24 = arith.constant 0 : index
    %59 = vector.load %arg8[%c24, %c0_24] : memref<72x256xf32, #tpu.memory_space<vmem>>, vector<4x256xf32>
    tpu.vector_store %arg8[%c24, %c0_24], %58 {strides = array<i32>} : memref<72x256xf32, #tpu.memory_space<vmem>>, vector<4x256xf32>,
    %c1_i32_25 = arith.constant 1 : i32
    %60 = tpu.dynamic_rotate %26 by %c1_i32_25 dim 1 : vector<4x256xf32>, i32 -> vector<4x256xf32>
    %61 = vector.broadcast %55 : vector<1x256xf32> to vector<4x256xf32>
    %62 = arith.mulf %60, %61 : vector<4x256xf32>
    %c28 = arith.constant 28 : index
    %c0_26 = arith.constant 0 : index
    %63 = vector.load %arg8[%c28, %c0_26] : memref<72x256xf32, #tpu.memory_space<vmem>>, vector<4x256xf32>
    tpu.vector_store %arg8[%c28, %c0_26], %62 {strides = array<i32>} : memref<72x256xf32, #tpu.memory_space<vmem>>, vector<4x256xf32>,
    %c32 = arith.constant 32 : index
    %c0_27 = arith.constant 0 : index
    %64 = vector.load %arg8[%c32, %c0_27] : memref<72x256xf32, #tpu.memory_space<vmem>>, vector<4x256xf32>
    tpu.vector_store %arg8[%c32, %c0_27], %1 {strides = array<i32>} : memref<72x256xf32, #tpu.memory_space<vmem>>, vector<4x256xf32>,
    %c36 = arith.constant 36 : index
    %c0_28 = arith.constant 0 : index
    %65 = vector.load %arg8[%c36, %c0_28] : memref<72x256xf32, #tpu.memory_space<vmem>>, vector<4x256xf32>
    tpu.vector_store %arg8[%c36, %c0_28], %26 {strides = array<i32>} : memref<72x256xf32, #tpu.memory_space<vmem>>, vector<4x256xf32>,
    %66 = vector.extract_strided_slice %27 {offsets = [5, 0], sizes = [1, 256], strides = [1, 1]} : vector<9x256xf32> to vector<1x256xf32>
    %c255_i32 = arith.constant 255 : i32
    %67 = tpu.dynamic_rotate %1 by %c255_i32 dim 1 : vector<4x256xf32>, i32 -> vector<4x256xf32>
    %68 = vector.broadcast %66 : vector<1x256xf32> to vector<4x256xf32>
    %69 = arith.mulf %67, %68 : vector<4x256xf32>
    %c40 = arith.constant 40 : index
    %c0_29 = arith.constant 0 : index
    %70 = vector.load %arg8[%c40, %c0_29] : memref<72x256xf32, #tpu.memory_space<vmem>>, vector<4x256xf32>
    tpu.vector_store %arg8[%c40, %c0_29], %69 {strides = array<i32>} : memref<72x256xf32, #tpu.memory_space<vmem>>, vector<4x256xf32>,
    %c255_i32_30 = arith.constant 255 : i32
    %71 = tpu.dynamic_rotate %26 by %c255_i32_30 dim 1 : vector<4x256xf32>, i32 -> vector<4x256xf32>
    %72 = vector.broadcast %66 : vector<1x256xf32> to vector<4x256xf32>
    %73 = arith.mulf %71, %72 : vector<4x256xf32>
    %c44 = arith.constant 44 : index
    %c0_31 = arith.constant 0 : index
    %74 = vector.load %arg8[%c44, %c0_31] : memref<72x256xf32, #tpu.memory_space<vmem>>, vector<4x256xf32>
    tpu.vector_store %arg8[%c44, %c0_31], %73 {strides = array<i32>} : memref<72x256xf32, #tpu.memory_space<vmem>>, vector<4x256xf32>,
    %75 = vector.extract_strided_slice %27 {offsets = [6, 0], sizes = [1, 256], strides = [1, 1]} : vector<9x256xf32> to vector<1x256xf32>
    %c241_i32 = arith.constant 241 : i32
    %76 = tpu.dynamic_rotate %1 by %c241_i32 dim 1 : vector<4x256xf32>, i32 -> vector<4x256xf32>
    %77 = vector.broadcast %75 : vector<1x256xf32> to vector<4x256xf32>
    %78 = arith.mulf %76, %77 : vector<4x256xf32>
    %c48 = arith.constant 48 : index
    %c0_32 = arith.constant 0 : index
    %79 = vector.load %arg8[%c48, %c0_32] : memref<72x256xf32, #tpu.memory_space<vmem>>, vector<4x256xf32>
    tpu.vector_store %arg8[%c48, %c0_32], %78 {strides = array<i32>} : memref<72x256xf32, #tpu.memory_space<vmem>>, vector<4x256xf32>,
    %c241_i32_33 = arith.constant 241 : i32
    %80 = tpu.dynamic_rotate %26 by %c241_i32_33 dim 1 : vector<4x256xf32>, i32 -> vector<4x256xf32>
    %81 = vector.broadcast %75 : vector<1x256xf32> to vector<4x256xf32>
    %82 = arith.mulf %80, %81 : vector<4x256xf32>
    %c52 = arith.constant 52 : index
    %c0_34 = arith.constant 0 : index
    %83 = vector.load %arg8[%c52, %c0_34] : memref<72x256xf32, #tpu.memory_space<vmem>>, vector<4x256xf32>
    tpu.vector_store %arg8[%c52, %c0_34], %82 {strides = array<i32>} : memref<72x256xf32, #tpu.memory_space<vmem>>, vector<4x256xf32>,
    %84 = vector.extract_strided_slice %27 {offsets = [7, 0], sizes = [1, 256], strides = [1, 1]} : vector<9x256xf32> to vector<1x256xf32>
    %c240_i32 = arith.constant 240 : i32
    %85 = tpu.dynamic_rotate %1 by %c240_i32 dim 1 : vector<4x256xf32>, i32 -> vector<4x256xf32>
    %86 = vector.broadcast %84 : vector<1x256xf32> to vector<4x256xf32>
    %87 = arith.mulf %85, %86 : vector<4x256xf32>
    %c56 = arith.constant 56 : index
    %c0_35 = arith.constant 0 : index
    %88 = vector.load %arg8[%c56, %c0_35] : memref<72x256xf32, #tpu.memory_space<vmem>>, vector<4x256xf32>
    tpu.vector_store %arg8[%c56, %c0_35], %87 {strides = array<i32>} : memref<72x256xf32, #tpu.memory_space<vmem>>, vector<4x256xf32>,
    %c240_i32_36 = arith.constant 240 : i32
    %89 = tpu.dynamic_rotate %26 by %c240_i32_36 dim 1 : vector<4x256xf32>, i32 -> vector<4x256xf32>
    %90 = vector.broadcast %84 : vector<1x256xf32> to vector<4x256xf32>
    %91 = arith.mulf %89, %90 : vector<4x256xf32>
    %c60 = arith.constant 60 : index
    %c0_37 = arith.constant 0 : index
    %92 = vector.load %arg8[%c60, %c0_37] : memref<72x256xf32, #tpu.memory_space<vmem>>, vector<4x256xf32>
    tpu.vector_store %arg8[%c60, %c0_37], %91 {strides = array<i32>} : memref<72x256xf32, #tpu.memory_space<vmem>>, vector<4x256xf32>,
    %93 = vector.extract_strided_slice %27 {offsets = [8, 0], sizes = [1, 256], strides = [1, 1]} : vector<9x256xf32> to vector<1x256xf32>
    %c239_i32 = arith.constant 239 : i32
    %94 = tpu.dynamic_rotate %1 by %c239_i32 dim 1 : vector<4x256xf32>, i32 -> vector<4x256xf32>
    %95 = vector.broadcast %93 : vector<1x256xf32> to vector<4x256xf32>
    %96 = arith.mulf %94, %95 : vector<4x256xf32>
    %c64 = arith.constant 64 : index
    %c0_38 = arith.constant 0 : index
    %97 = vector.load %arg8[%c64, %c0_38] : memref<72x256xf32, #tpu.memory_space<vmem>>, vector<4x256xf32>
    tpu.vector_store %arg8[%c64, %c0_38], %96 {strides = array<i32>} : memref<72x256xf32, #tpu.memory_space<vmem>>, vector<4x256xf32>,
    %c239_i32_39 = arith.constant 239 : i32
    %98 = tpu.dynamic_rotate %26 by %c239_i32_39 dim 1 : vector<4x256xf32>, i32 -> vector<4x256xf32>
    %99 = vector.broadcast %93 : vector<1x256xf32> to vector<4x256xf32>
    %100 = arith.mulf %98, %99 : vector<4x256xf32>
    %c68 = arith.constant 68 : index
    %c0_40 = arith.constant 0 : index
    %101 = vector.load %arg8[%c68, %c0_40] : memref<72x256xf32, #tpu.memory_space<vmem>>, vector<4x256xf32>
    tpu.vector_store %arg8[%c68, %c0_40], %100 {strides = array<i32>} : memref<72x256xf32, #tpu.memory_space<vmem>>, vector<4x256xf32>,
    %c0_41 = arith.constant 0 : index
    %c0_42 = arith.constant 0 : index
    %102 = vector.load %arg4[%c0_41, %c0_42] : memref<16x72xf32, #tpu.memory_space<vmem>>, vector<16x72xf32>
    %c0_43 = arith.constant 0 : index
    %c0_44 = arith.constant 0 : index
    %103 = vector.load %arg8[%c0_43, %c0_44] : memref<72x256xf32, #tpu.memory_space<vmem>>, vector<72x256xf32>
    %cst_45 = arith.constant dense<0.000000e+00> : vector<16x256xf32>
    %104 = tpu.matmul %102, %103, %cst_45 {dimension_numbers = #tpu.dot_dimension_numbers<[1], [0], [0], [1], [0, 0, 1, 1], [], []>} : vector<16x72xf32>, vector<72x256xf32>, vector<16x256xf32> -> vector<16x256xf32>
    %105 = vector.extract_strided_slice %104 {offsets = [0, 0], sizes = [8, 256], strides = [1, 1]} : vector<16x256xf32> to vector<8x256xf32>
    %106 = vector.extract_strided_slice %104 {offsets = [8, 0], sizes = [8, 256], strides = [1, 1]} : vector<16x256xf32> to vector<8x256xf32>
    %c0_46 = arith.constant 0 : index
    %c0_47 = arith.constant 0 : index
    %107 = vector.load %arg5[%c0_46, %c0_47] : memref<8x256xf32, #tpu.memory_space<vmem>>, vector<8x256xf32>
    %108 = arith.addf %106, %107 : vector<8x256xf32>
    %cst_48 = arith.constant 5.000000e-01 : f32
    %109 = vector.broadcast %cst_48 : f32 to vector<8x256xf32>
    %110 = arith.mulf %109, %108 : vector<8x256xf32>
    %111 = math.tanh %110 : vector<8x256xf32>
    %cst_49 = arith.constant 5.000000e-01 : f32
    %112 = vector.broadcast %cst_49 : f32 to vector<8x256xf32>
    %113 = arith.mulf %112, %111 : vector<8x256xf32>
    %cst_50 = arith.constant 5.000000e-01 : f32
    %114 = vector.broadcast %cst_50 : f32 to vector<8x256xf32>
    %115 = arith.addf %113, %114 : vector<8x256xf32>
    %116 = arith.mulf %105, %115 : vector<8x256xf32>
    %c17_i32_51 = arith.constant 17 : i32
    %117 = tpu.dynamic_rotate %116 by %c17_i32_51 dim 1 : vector<8x256xf32>, i32 -> vector<8x256xf32>
    %118 = vector.extract_strided_slice %27 {offsets = [0, 0], sizes = [1, 256], strides = [1, 1]} : vector<9x256xf32> to vector<1x256xf32>
    %119 = vector.broadcast %118 : vector<1x256xf32> to vector<8x256xf32>
    %120 = arith.mulf %117, %119 : vector<8x256xf32>
    %c0_52 = arith.constant 0 : index
    %c0_53 = arith.constant 0 : index
    %121 = vector.load %arg8[%c0_52, %c0_53] : memref<72x256xf32, #tpu.memory_space<vmem>>, vector<8x256xf32>
    tpu.vector_store %arg8[%c0_52, %c0_53], %120 {strides = array<i32>} : memref<72x256xf32, #tpu.memory_space<vmem>>, vector<8x256xf32>,
    %c16_i32_54 = arith.constant 16 : i32
    %122 = tpu.dynamic_rotate %116 by %c16_i32_54 dim 1 : vector<8x256xf32>, i32 -> vector<8x256xf32>
    %123 = vector.extract_strided_slice %27 {offsets = [1, 0], sizes = [1, 256], strides = [1, 1]} : vector<9x256xf32> to vector<1x256xf32>
    %124 = vector.broadcast %123 : vector<1x256xf32> to vector<8x256xf32>
    %125 = arith.mulf %122, %124 : vector<8x256xf32>
    %c8_55 = arith.constant 8 : index
    %c0_56 = arith.constant 0 : index
    %126 = vector.load %arg8[%c8_55, %c0_56] : memref<72x256xf32, #tpu.memory_space<vmem>>, vector<8x256xf32>
    tpu.vector_store %arg8[%c8_55, %c0_56], %125 {strides = array<i32>} : memref<72x256xf32, #tpu.memory_space<vmem>>, vector<8x256xf32>,
    %c15_i32_57 = arith.constant 15 : i32
    %127 = tpu.dynamic_rotate %116 by %c15_i32_57 dim 1 : vector<8x256xf32>, i32 -> vector<8x256xf32>
    %128 = vector.extract_strided_slice %27 {offsets = [2, 0], sizes = [1, 256], strides = [1, 1]} : vector<9x256xf32> to vector<1x256xf32>
    %129 = vector.broadcast %128 : vector<1x256xf32> to vector<8x256xf32>
    %130 = arith.mulf %127, %129 : vector<8x256xf32>
    %c16_58 = arith.constant 16 : index
    %c0_59 = arith.constant 0 : index
    %131 = vector.load %arg8[%c16_58, %c0_59] : memref<72x256xf32, #tpu.memory_space<vmem>>, vector<8x256xf32>
    tpu.vector_store %arg8[%c16_58, %c0_59], %130 {strides = array<i32>} : memref<72x256xf32, #tpu.memory_space<vmem>>, vector<8x256xf32>,
    %c1_i32_60 = arith.constant 1 : i32
    %132 = tpu.dynamic_rotate %116 by %c1_i32_60 dim 1 : vector<8x256xf32>, i32 -> vector<8x256xf32>
    %133 = vector.extract_strided_slice %27 {offsets = [3, 0], sizes = [1, 256], strides = [1, 1]} : vector<9x256xf32> to vector<1x256xf32>
    %134 = vector.broadcast %133 : vector<1x256xf32> to vector<8x256xf32>
    %135 = arith.mulf %132, %134 : vector<8x256xf32>
    %c24_61 = arith.constant 24 : index
    %c0_62 = arith.constant 0 : index
    %136 = vector.load %arg8[%c24_61, %c0_62] : memref<72x256xf32, #tpu.memory_space<vmem>>, vector<8x256xf32>
    tpu.vector_store %arg8[%c24_61, %c0_62], %135 {strides = array<i32>} : memref<72x256xf32, #tpu.memory_space<vmem>>, vector<8x256xf32>,
    %c32_63 = arith.constant 32 : index
    %c0_64 = arith.constant 0 : index
    %137 = vector.load %arg8[%c32_63, %c0_64] : memref<72x256xf32, #tpu.memory_space<vmem>>, vector<8x256xf32>
    tpu.vector_store %arg8[%c32_63, %c0_64], %116 {strides = array<i32>} : memref<72x256xf32, #tpu.memory_space<vmem>>, vector<8x256xf32>,
    %c255_i32_65 = arith.constant 255 : i32
    %138 = tpu.dynamic_rotate %116 by %c255_i32_65 dim 1 : vector<8x256xf32>, i32 -> vector<8x256xf32>
    %139 = vector.extract_strided_slice %27 {offsets = [5, 0], sizes = [1, 256], strides = [1, 1]} : vector<9x256xf32> to vector<1x256xf32>
    %140 = vector.broadcast %139 : vector<1x256xf32> to vector<8x256xf32>
    %141 = arith.mulf %138, %140 : vector<8x256xf32>
    %c40_66 = arith.constant 40 : index
    %c0_67 = arith.constant 0 : index
    %142 = vector.load %arg8[%c40_66, %c0_67] : memref<72x256xf32, #tpu.memory_space<vmem>>, vector<8x256xf32>
    tpu.vector_store %arg8[%c40_66, %c0_67], %141 {strides = array<i32>} : memref<72x256xf32, #tpu.memory_space<vmem>>, vector<8x256xf32>,
    %c241_i32_68 = arith.constant 241 : i32
    %143 = tpu.dynamic_rotate %116 by %c241_i32_68 dim 1 : vector<8x256xf32>, i32 -> vector<8x256xf32>
    %144 = vector.extract_strided_slice %27 {offsets = [6, 0], sizes = [1, 256], strides = [1, 1]} : vector<9x256xf32> to vector<1x256xf32>
    %145 = vector.broadcast %144 : vector<1x256xf32> to vector<8x256xf32>
    %146 = arith.mulf %143, %145 : vector<8x256xf32>
    %c48_69 = arith.constant 48 : index
    %c0_70 = arith.constant 0 : index
    %147 = vector.load %arg8[%c48_69, %c0_70] : memref<72x256xf32, #tpu.memory_space<vmem>>, vector<8x256xf32>
    tpu.vector_store %arg8[%c48_69, %c0_70], %146 {strides = array<i32>} : memref<72x256xf32, #tpu.memory_space<vmem>>, vector<8x256xf32>,
    %c240_i32_71 = arith.constant 240 : i32
    %148 = tpu.dynamic_rotate %116 by %c240_i32_71 dim 1 : vector<8x256xf32>, i32 -> vector<8x256xf32>
    %149 = vector.extract_strided_slice %27 {offsets = [7, 0], sizes = [1, 256], strides = [1, 1]} : vector<9x256xf32> to vector<1x256xf32>
    %150 = vector.broadcast %149 : vector<1x256xf32> to vector<8x256xf32>
    %151 = arith.mulf %148, %150 : vector<8x256xf32>
    %c56_72 = arith.constant 56 : index
    %c0_73 = arith.constant 0 : index
    %152 = vector.load %arg8[%c56_72, %c0_73] : memref<72x256xf32, #tpu.memory_space<vmem>>, vector<8x256xf32>
    tpu.vector_store %arg8[%c56_72, %c0_73], %151 {strides = array<i32>} : memref<72x256xf32, #tpu.memory_space<vmem>>, vector<8x256xf32>,
    %c239_i32_74 = arith.constant 239 : i32
    %153 = tpu.dynamic_rotate %116 by %c239_i32_74 dim 1 : vector<8x256xf32>, i32 -> vector<8x256xf32>
    %154 = vector.extract_strided_slice %27 {offsets = [8, 0], sizes = [1, 256], strides = [1, 1]} : vector<9x256xf32> to vector<1x256xf32>
    %155 = vector.broadcast %154 : vector<1x256xf32> to vector<8x256xf32>
    %156 = arith.mulf %153, %155 : vector<8x256xf32>
    %c64_75 = arith.constant 64 : index
    %c0_76 = arith.constant 0 : index
    %157 = vector.load %arg8[%c64_75, %c0_76] : memref<72x256xf32, #tpu.memory_space<vmem>>, vector<8x256xf32>
    tpu.vector_store %arg8[%c64_75, %c0_76], %156 {strides = array<i32>} : memref<72x256xf32, #tpu.memory_space<vmem>>, vector<8x256xf32>,
    %c0_77 = arith.constant 0 : index
    %c0_78 = arith.constant 0 : index
    %158 = vector.load %arg6[%c0_77, %c0_78] : memref<4x72xf32, #tpu.memory_space<vmem>>, vector<4x72xf32>
    %c0_79 = arith.constant 0 : index
    %c0_80 = arith.constant 0 : index
    %159 = vector.load %arg8[%c0_79, %c0_80] : memref<72x256xf32, #tpu.memory_space<vmem>>, vector<72x256xf32>
    %cst_81 = arith.constant dense<0.000000e+00> : vector<4x256xf32>
    %160 = tpu.matmul %158, %159, %cst_81 {dimension_numbers = #tpu.dot_dimension_numbers<[1], [0], [0], [1], [0, 0, 1, 1], [], []>} : vector<4x72xf32>, vector<72x256xf32>, vector<4x256xf32> -> vector<4x256xf32>
    %c0_82 = arith.constant 0 : index
    %c0_83 = arith.constant 0 : index
    %c0_84 = arith.constant 0 : index
    %161 = vector.load %arg7[%c0_82, %c0_83, %c0_84] : memref<1x4x256xf32, #tpu.memory_space<vmem>>, vector<1x4x256xf32>
    %162 = vector.shape_cast %161 : vector<1x4x256xf32> to vector<4x256xf32>
    %163 = vector.shape_cast %160 : vector<4x256xf32> to vector<1x4x256xf32>
    tpu.vector_store %arg7[%c0_82, %c0_83, %c0_84], %163 {strides = array<i32>} : memref<1x4x256xf32, #tpu.memory_space<vmem>>, vector<1x4x256xf32>,
    return
  }
  func.func @transform_0(%arg0: i32) -> (i32, i32, i32) {
    %c0_i32 = arith.constant 0 : i32
    %c0_i32_0 = arith.constant 0 : i32
    %c0_i32_1 = arith.constant 0 : i32
    return %arg0, %c0_i32, %c0_i32_0 : i32, i32, i32
  }
  func.func @transform_1(%arg0: i32) -> (i32, i32, i32) {
    %c0_i32 = arith.constant 0 : i32
    %c0_i32_0 = arith.constant 0 : i32
    %c0_i32_1 = arith.constant 0 : i32
    return %arg0, %c0_i32, %c0_i32_0 : i32, i32, i32
  }
  func.func @transform_2(%arg0: i32) -> (i32, i32) {
    %c0_i32 = arith.constant 0 : i32
    %c0_i32_0 = arith.constant 0 : i32
    %c0_i32_1 = arith.constant 0 : i32
    return %c0_i32, %c0_i32_0 : i32, i32
  }
  func.func @transform_3(%arg0: i32) -> (i32, i32) {
    %c0_i32 = arith.constant 0 : i32
    %c0_i32_0 = arith.constant 0 : i32
    %c0_i32_1 = arith.constant 0 : i32
    return %c0_i32, %c0_i32_0 : i32, i32
  }
  func.func @transform_4(%arg0: i32) -> (i32, i32) {
    %c0_i32 = arith.constant 0 : i32
    %c0_i32_0 = arith.constant 0 : i32
    %c0_i32_1 = arith.constant 0 : i32
    return %c0_i32, %c0_i32_0 : i32, i32
  }
  func.func @transform_5(%arg0: i32) -> (i32, i32) {
    %c0_i32 = arith.constant 0 : i32
    %c0_i32_0 = arith.constant 0 : i32
    %c0_i32_1 = arith.constant 0 : i32
    return %c0_i32, %c0_i32_0 : i32, i32
  }
  func.func @transform_6(%arg0: i32) -> (i32, i32, i32) {
    %c0_i32 = arith.constant 0 : i32
    %c0_i32_0 = arith.constant 0 : i32
    %c0_i32_1 = arith.constant 0 : i32
    return %arg0, %c0_i32, %c0_i32_0 : i32, i32, i32
  }
}

</mosaic_0001>

<llo_original>
// kernel: tpu_custom_call.1
$region0: #{tpu_custom_call.1}
  #allocation0 [shape = 'u32[]', space=smem, size = 0x4, offset = 0x4, fixed_abs, tag = 'smem constant byte address 0x4 - core index']
  #allocation1 [shape = 'u32[72,128]{1,0:T(1,128)}', space=vmem, size = 0x9000, scoped, tag = 'internal scratch']
  #allocation2 [shape = 'f32[72,256]{1,0:T(8,128)}', space=vmem, size = 0x12000, scoped, tag = 'scratch operand']
  %s0 = inlined_call_operand.hbm [shape: f32[2,4,256], index: 0, kind: input, shape index: {}]
  %s1 = inlined_call_operand.hbm [shape: f32[2,4,256], index: 1, kind: input, shape index: {}]
  %s2 = inlined_call_operand.hbm [shape: f32[9,256], index: 2, kind: input, shape index: {}]
  %s3 = inlined_call_operand.hbm [shape: f32[16,72], index: 3, kind: input, shape index: {}]
  %s4 = inlined_call_operand.hbm [shape: f32[8,256], index: 4, kind: input, shape index: {}]
  %s5 = inlined_call_operand.vmem [shape: f32[4,72], index: 5, kind: input, shape index: {}]
  %s6 = inlined_call_operand.hbm [shape: f32[2,4,256], index: 6, kind: output, shape index: {}]
  %s7 = sld [smem:[#allocation0]]
  $region77: #{tpu_custom_call.1} parent=0
    _
  %s9 = ssub.s32 1, %s7
  %s10 = scalar_select 0, %s9, %s7
  $region1: #{tpu_custom_call.1} parent=0
    #allocation3 [shape = 'u8[8192]{0}', space=vmem, size = 0x2000, scoped, tag = 'input window, operand 0']
    #allocation4 [shape = 's32[2]{0}', space=sflag, size = 0x8, scoped, tag = 'scoped memory for tpu_custom_call.1']
    #allocation5 [shape = 's32[2]{0}', space=sflag, size = 0x8, scoped, tag = 'scoped memory for tpu_custom_call.1']
    #allocation6 [shape = 'u8[8192]{0}', space=vmem, size = 0x2000, scoped, tag = 'input window, operand 1']
    #allocation7 [shape = 's32[2]{0}', space=sflag, size = 0x8, scoped, tag = 'scoped memory for tpu_custom_call.1']
    #allocation8 [shape = 'u8[16384]{0}', space=vmem, size = 0x4000, scoped, tag = 'input window, operand 2, single buffered']
    #allocation9 [shape = 'u8[8192]{0}', space=vmem, size = 0x2000, scoped, tag = 'input window, operand 3, single buffered']
    #allocation10 [shape = 's32[1]{0}', space=sflag, size = 0x4, scoped, tag = 'scoped memory for tpu_custom_call.1']
    #allocation11 [shape = 'u8[8192]{0}', space=vmem, size = 0x2000, scoped, tag = 'input window, operand 4, single buffered']
    #allocation12 [shape = 'u8[8192]{0}', space=vmem, size = 0x2000, scoped, tag = 'output window, operand 0']
    %11 = vsyncpa [#allocation4], 0
    %s12 = scalar_lea.sflag [#allocation4], 1
    %13 = vsyncpa %s12, 0
    %14 = vsyncpa [#allocation7], 0
    %s15 = scalar_lea.sflag [#allocation7], 1
    %16 = vsyncpa %s15, 0
    %17 = vsyncpa [#allocation10], 0
    %18 = vsyncpa [#allocation5], 0
    %s19 = scalar_lea.sflag [#allocation5], 1
    %20 = vsyncpa %s19, 0
    loop: start=0, step=1, limit=4
    $region2: #{tpu_custom_call.1} parent=1 // loop_pre_header
      _
    $region3: #{tpu_custom_call.1} parent=1 // loop_header
      %s22 = sphi 0, %s26
      %p23 = scmp.ge.s32.totalorder %s22, 4
      %s32 = sphi 0, %s34
      %s35 = sphi 0, %s32
      %s36 = sphi 0, %s35
      %s52 = sphi 0, %s36
      %s58 = sphi 0, %s60
      %s61 = sphi 0, %s58
      %s62 = sphi 0, %s61
      %s78 = sphi 0, %s62
      %s82 = sphi 0, %s82
      %s84 = sphi 0, %s82
      %s85 = sphi 0, %s84
      %s99 = sphi 0, %s85
      %s103 = sphi 0, %s103
      %s105 = sphi 0, %s103
      %s106 = sphi 0, %s105
      %s120 = sphi 0, %s106
      %s124 = sphi 0, %s124
      %s126 = sphi 0, %s124
      %s127 = sphi 0, %s126
      %s141 = sphi 0, %s127
      %s145 = sphi 0, %s145
      %s147 = sphi 0, %s145
      %s148 = sphi 0, %s147
      %s162 = sphi 0, %s148
      %s168 = sphi 0, %s170
      %s171 = sphi 0, %s168
      %s172 = sphi 0, %s171
      %s188 = sphi 0, %s172
    $region4: #{tpu_custom_call.1} parent=1 // loop_header_branch
      %25 = sbr.rel (%p23) target = $region8
    $region5: #{tpu_custom_call.1} parent=1 // loop_body
      %s27 = ssub.s32 %s22, 1
      %s28 = ssub.s32 %s22, 2
      %s29 = sadd.s32 %s22, 1
      %s30 = ssub.s32 %s22, %s29
      %p31 = scmp.eq.s32.totalorder %s30, 0
      %s33 = sadd.s32 %s32, 1
      %s34 = scalar_select %p31, %s32, %s33
      %p37 = pneg %p31
      %p38 = scmp.eq.s32.totalorder %s22, 1
      %p39 = por %p37, %p38
      %p40 = scmp.ne.s32.totalorder %s32, %s35
      %p41 = scmp.eq.s32.totalorder %s22, 0
      %p42 = por %p40, %p41
      %p43 = scmp.ne.s32.totalorder %s32, %s35
      %p44 = scmp.eq.s32.totalorder %s27, 1
      %p45 = por %p43, %p44
      %p46 = scmp.ne.s32.totalorder %s35, %s36
      %p47 = scmp.eq.s32.totalorder %s27, 0
      %p48 = por %p46, %p47
      %p49 = scmp.ne.s32.totalorder %s35, %s36
      %p50 = scmp.eq.s32.totalorder %s28, 1
      %p51 = por %p49, %p50
      %p53 = scmp.ne.s32.totalorder %s36, %s52
      %p54 = scmp.eq.s32.totalorder %s28, 0
      %p55 = por %p53, %p54
      %s56 = ssub.s32 %s22, %s29
      %p57 = scmp.eq.s32.totalorder %s56, 0
      %s59 = sadd.s32 %s58, 1
      %s60 = scalar_select %p57, %s58, %s59
      %p63 = pneg %p57
      %p64 = scmp.eq.s32.totalorder %s22, 1
      %p65 = por %p63, %p64
      %p66 = scmp.ne.s32.totalorder %s58, %s61
      %p67 = scmp.eq.s32.totalorder %s22, 0
      %p68 = por %p66, %p67
      %p69 = scmp.ne.s32.totalorder %s58, %s61
      %p70 = scmp.eq.s32.totalorder %s27, 1
      %p71 = por %p69, %p70
      %p72 = scmp.ne.s32.totalorder %s61, %s62
      %p73 = scmp.eq.s32.totalorder %s27, 0
      %p74 = por %p72, %p73
      %p75 = scmp.ne.s32.totalorder %s61, %s62
      %p76 = scmp.eq.s32.totalorder %s28, 1
      %p77 = por %p75, %p76
      %p79 = scmp.ne.s32.totalorder %s62, %s78
      %p80 = scmp.eq.s32.totalorder %s28, 0
      %p81 = por %p79, %p80
      %s83 = sadd.s32 %s82, 1
      %p86 = scmp.eq.s32.totalorder %s22, 1
      %p87 = scmp.ne.s32.totalorder %s82, %s84
      %p88 = scmp.eq.s32.totalorder %s22, 0
      %p89 = por %p87, %p88
      %p90 = scmp.ne.s32.totalorder %s82, %s84
      %p91 = scmp.eq.s32.totalorder %s27, 1
      %p92 = por %p90, %p91
      %p93 = scmp.ne.s32.totalorder %s84, %s85
      %p94 = scmp.eq.s32.totalorder %s27, 0
      %p95 = por %p93, %p94
      %p96 = scmp.ne.s32.totalorder %s84, %s85
      %p97 = scmp.eq.s32.totalorder %s28, 1
      %p98 = por %p96, %p97
      %p100 = scmp.ne.s32.totalorder %s85, %s99
      %p101 = scmp.eq.s32.totalorder %s28, 0
      %p102 = por %p100, %p101
      %s104 = sadd.s32 %s103, 1
      %p107 = scmp.eq.s32.totalorder %s22, 1
      %p108 = scmp.ne.s32.totalorder %s103, %s105
      %p109 = scmp.eq.s32.totalorder %s22, 0
      %p110 = por %p108, %p109
      %p111 = scmp.ne.s32.totalorder %s103, %s105
      %p112 = scmp.eq.s32.totalorder %s27, 1
      %p113 = por %p111, %p112
      %p114 = scmp.ne.s32.totalorder %s105, %s106
      %p115 = scmp.eq.s32.totalorder %s27, 0
      %p116 = por %p114, %p115
      %p117 = scmp.ne.s32.totalorder %s105, %s106
      %p118 = scmp.eq.s32.totalorder %s28, 1
      %p119 = por %p117, %p118
      %p121 = scmp.ne.s32.totalorder %s106, %s120
      %p122 = scmp.eq.s32.totalorder %s28, 0
      %p123 = por %p121, %p122
      %s125 = sadd.s32 %s124, 1
      %p128 = scmp.eq.s32.totalorder %s22, 1
      %p129 = scmp.ne.s32.totalorder %s124, %s126
      %p130 = scmp.eq.s32.totalorder %s22, 0
      %p131 = por %p129, %p130
      %p132 = scmp.ne.s32.totalorder %s124, %s126
      %p133 = scmp.eq.s32.totalorder %s27, 1
      %p134 = por %p132, %p133
      %p135 = scmp.ne.s32.totalorder %s126, %s127
      %p136 = scmp.eq.s32.totalorder %s27, 0
      %p137 = por %p135, %p136
      %p138 = scmp.ne.s32.totalorder %s126, %s127
      %p139 = scmp.eq.s32.totalorder %s28, 1
      %p140 = por %p138, %p139
      %p142 = scmp.ne.s32.totalorder %s127, %s141
      %p143 = scmp.eq.s32.totalorder %s28, 0
      %p144 = por %p142, %p143
      %s146 = sadd.s32 %s145, 1
      %p149 = scmp.eq.s32.totalorder %s22, 1
      %p150 = scmp.ne.s32.totalorder %s145, %s147
      %p151 = scmp.eq.s32.totalorder %s22, 0
      %p152 = por %p150, %p151
      %p153 = scmp.ne.s32.totalorder %s145, %s147
      %p154 = scmp.eq.s32.totalorder %s27, 1
      %p155 = por %p153, %p154
      %p156 = scmp.ne.s32.totalorder %s147, %s148
      %p157 = scmp.eq.s32.totalorder %s27, 0
      %p158 = por %p156, %p157
      %p159 = scmp.ne.s32.totalorder %s147, %s148
      %p160 = scmp.eq.s32.totalorder %s28, 1
      %p161 = por %p159, %p160
      %p163 = scmp.ne.s32.totalorder %s148, %s162
      %p164 = scmp.eq.s32.totalorder %s28, 0
      %p165 = por %p163, %p164
      %s166 = ssub.s32 %s22, %s29
      %p167 = scmp.eq.s32.totalorder %s166, 0
      %s169 = sadd.s32 %s168, 1
      %s170 = scalar_select %p167, %s168, %s169
      %p173 = pneg %p167
      %p174 = scmp.eq.s32.totalorder %s22, 1
      %p175 = por %p173, %p174
      %p176 = scmp.ne.s32.totalorder %s168, %s171
      %p177 = scmp.eq.s32.totalorder %s22, 0
      %p178 = por %p176, %p177
      %p179 = scmp.ne.s32.totalorder %s168, %s171
      %p180 = scmp.eq.s32.totalorder %s27, 1
      %p181 = por %p179, %p180
      %p182 = scmp.ne.s32.totalorder %s171, %s172
      %p183 = scmp.eq.s32.totalorder %s27, 0
      %p184 = por %p182, %p183
      %p185 = scmp.ne.s32.totalorder %s171, %s172
      %p186 = scmp.eq.s32.totalorder %s28, 1
      %p187 = por %p185, %p186
      %p189 = scmp.ne.s32.totalorder %s172, %s188
      %p190 = scmp.eq.s32.totalorder %s28, 0
      %p191 = por %p189, %p190
      %p192 = scmp.le.s32.totalorder 1, %s22
      %p193 = scmp.lt.s32.totalorder %s22, 3
      %p194 = pnand %p192, %p193
      %p195 = pneg %p194
      // Predicated region
      $region9: #{tpu_custom_call.1} parent=5 // pred_check
        _
      $region10: #{tpu_custom_call.1} parent=5 // pred_check_branch
        %197 = sbr.rel (%p194) target = $region12
      $region11: #{tpu_custom_call.1} parent=5 // pred_region
        %s198 = ssub.s32 %s22, 1
        // Predicated region
        $region13: #{tpu_custom_call.1} parent=11 // pred_check
          %p199 = pneg %p95
        $region14: #{tpu_custom_call.1} parent=11 // pred_check_branch
          %201 = sbr.rel (%p199) target = $region16
        $region15: #{tpu_custom_call.1} parent=11 // pred_region
          %203 = vsyncadd [#allocation7], 0
          %s204 = sshll.u32 %s2, 4
          %s205 = int_to_ptr.hbm [resolvable:$true] %s204
          %s206 = sshll.u32 [#allocation8], 4
          %s207 = int_to_ptr.vmem [resolvable:$true] %s206
          %212 = dma.hbm_to_vmem [thread:$0]  %s205, 512, %s207, [#allocation7], 256, 256, 16
        $region16: #{tpu_custom_call.1} parent=11 // pred_fallthru
          _
        // Predicated region
        $region17: #{tpu_custom_call.1} parent=11 // pred_check
          %p213 = pneg %p116
        $region18: #{tpu_custom_call.1} parent=11 // pred_check_branch
          %215 = sbr.rel (%p213) target = $region20
        $region19: #{tpu_custom_call.1} parent=11 // pred_region
          %217 = vsyncadd [#allocation10], 0
          %s218 = sshll.u32 %s3, 4
          %s219 = int_to_ptr.hbm [resolvable:$true] %s218
          %s220 = sshll.u32 [#allocation9], 4
          %s221 = int_to_ptr.vmem [resolvable:$true] %s220
          %226 = dma.hbm_to_vmem [thread:$0]  %s219, 256, %s221, [#allocation10], 128, 128, 8
        $region20: #{tpu_custom_call.1} parent=11 // pred_fallthru
          _
        // Predicated region
        $region21: #{tpu_custom_call.1} parent=11 // pred_check
          %p227 = pneg %p137
        $region22: #{tpu_custom_call.1} parent=11 // pred_check_branch
          %229 = sbr.rel (%p227) target = $region24
        $region23: #{tpu_custom_call.1} parent=11 // pred_region
          %231 = vsyncadd [#allocation10], 0
          %s233 = sshll.u32 %s4, 4
          %s234 = int_to_ptr.hbm [resolvable:$true] %s233
          %s235 = sshll.u32 [#allocation11], 4
          %s236 = int_to_ptr.vmem [resolvable:$true] %s235
          %238 = dma.hbm_to_vmem [thread:$0]  %s234, 256, %s236, [#allocation10]
        $region24: #{tpu_custom_call.1} parent=11 // pred_fallthru
          _
        // Predicated region
        $region25: #{tpu_custom_call.1} parent=11 // pred_check
          %p239 = pneg %p158
        $region26: #{tpu_custom_call.1} parent=11 // pred_check_branch
          %241 = sbr.rel (%p239) target = $region28
        $region27: #{tpu_custom_call.1} parent=11 // pred_region
          _
        $region28: #{tpu_custom_call.1} parent=11 // pred_fallthru
          _
      $region12: #{tpu_custom_call.1} parent=5 // pred_fallthru
        _
      %p242 = scmp.lt.s32.totalorder %s22, 2
      // Predicated region
      $region29: #{tpu_custom_call.1} parent=5 // pred_check
        %p243 = pneg %p242
      $region30: #{tpu_custom_call.1} parent=5 // pred_check_branch
        %245 = sbr.rel (%p243) target = $region32
      $region31: #{tpu_custom_call.1} parent=5 // pred_region
        // Predicated region
        $region33: #{tpu_custom_call.1} parent=31 // pred_check
          %p246 = pneg %p42
        $region34: #{tpu_custom_call.1} parent=31 // pred_check_branch
          %248 = sbr.rel (%p246) target = $region36
        $region35: #{tpu_custom_call.1} parent=31 // pred_region
          %s249 = sand.u32 %s32, 1
          %s250 = scalar_lea.sflag [#allocation4], %s249
          %s251 = sand.u32 %s32, 1
          %s252 = smul.addr %s251, 8
          %s253 = scalar_lea.vmem [#allocation3], %s252
          %255 = vsyncadd %s250, 0
          %s256 = smul.addr %s22, 2
          %s257 = smul.addr %s256, 4
          %s258 = scalar_lea.hbm %s0, %s257
          %s260 = sshll.u32 %s258, 4
          %s261 = int_to_ptr.hbm [resolvable:$true] %s260
          %s262 = sshll.u32 %s253, 4
          %s263 = int_to_ptr.vmem [resolvable:$true] %s262
          %265 = dma.hbm_to_vmem [thread:$0]  %s261, 128, %s263, %s250
        $region36: #{tpu_custom_call.1} parent=31 // pred_fallthru
          _
        // Predicated region
        $region37: #{tpu_custom_call.1} parent=31 // pred_check
          %p266 = pneg %p68
        $region38: #{tpu_custom_call.1} parent=31 // pred_check_branch
          %268 = sbr.rel (%p266) target = $region40
        $region39: #{tpu_custom_call.1} parent=31 // pred_region
          %s269 = sand.u32 %s22, 1
          %s270 = scalar_lea.sflag [#allocation7], %s269
          %s271 = sand.u32 %s58, 1
          %s272 = smul.addr %s271, 8
          %s273 = scalar_lea.vmem [#allocation6], %s272
          %275 = vsyncadd %s270, 0
          %s276 = smul.addr %s22, 2
          %s277 = smul.addr %s276, 4
          %s278 = scalar_lea.hbm %s1, %s277
          %s280 = sshll.u32 %s278, 4
          %s281 = int_to_ptr.hbm [resolvable:$true] %s280
          %s282 = sshll.u32 %s273, 4
          %s283 = int_to_ptr.vmem [resolvable:$true] %s282
          %285 = dma.hbm_to_vmem [thread:$0]  %s281, 128, %s283, %s270
        $region40: #{tpu_custom_call.1} parent=31 // pred_fallthru
          _
      $region32: #{tpu_custom_call.1} parent=5 // pred_fallthru
        _
      %p286 = scmp.le.s32.totalorder 1, %s22
      %p287 = scmp.lt.s32.totalorder %s22, 3
      %p288 = pnand %p286, %p287
      %p289 = pneg %p288
      // Predicated region
      $region41: #{tpu_custom_call.1} parent=5 // pred_check
        _
      $region42: #{tpu_custom_call.1} parent=5 // pred_check_branch
        %291 = sbr.rel (%p288) target = $region44
      $region43: #{tpu_custom_call.1} parent=5 // pred_region
        %s292 = ssub.s32 %s22, 1
        %s293 = sand.u32 %s35, 1
        %s294 = scalar_lea.sflag [#allocation4], %s293
        %s295 = sand.u32 %s35, 1
        %s296 = smul.addr %s295, 8
        %s297 = scalar_lea.vmem [#allocation3], %s296
        // Predicated region
        $region45: #{tpu_custom_call.1} parent=43 // pred_check
          %p298 = pneg %p48
        $region46: #{tpu_custom_call.1} parent=43 // pred_check_branch
          %300 = sbr.rel (%p298) target = $region48
        $region47: #{tpu_custom_call.1} parent=43 // pred_region
          %302 = dma.done %s294, 128
        $region48: #{tpu_custom_call.1} parent=43 // pred_fallthru
          _
        %s303 = sand.u32 %s27, 1
        %s304 = scalar_lea.sflag [#allocation7], %s303
        %s305 = sand.u32 %s61, 1
        %s306 = smul.addr %s305, 8
        %s307 = scalar_lea.vmem [#allocation6], %s306
        // Predicated region
        $region49: #{tpu_custom_call.1} parent=43 // pred_check
          %p308 = pneg %p74
        $region50: #{tpu_custom_call.1} parent=43 // pred_check_branch
          %310 = sbr.rel (%p308) target = $region52
        $region51: #{tpu_custom_call.1} parent=43 // pred_region
          %312 = dma.done %s304, 128
        $region52: #{tpu_custom_call.1} parent=43 // pred_fallthru
          _
        // Predicated region
        $region53: #{tpu_custom_call.1} parent=43 // pred_check
          %p313 = pneg %p95
        $region54: #{tpu_custom_call.1} parent=43 // pred_check_branch
          %315 = sbr.rel (%p313) target = $region56
        $region55: #{tpu_custom_call.1} parent=43 // pred_region
          %317 = dma.done [#allocation7], 512
        $region56: #{tpu_custom_call.1} parent=43 // pred_fallthru
          _
        // Predicated region
        $region57: #{tpu_custom_call.1} parent=43 // pred_check
          %p318 = pneg %p116
        $region58: #{tpu_custom_call.1} parent=43 // pred_check_branch
          %320 = sbr.rel (%p318) target = $region60
        $region59: #{tpu_custom_call.1} parent=43 // pred_region
          %322 = dma.done [#allocation10], 256
        $region60: #{tpu_custom_call.1} parent=43 // pred_fallthru
          _
        // Predicated region
        $region61: #{tpu_custom_call.1} parent=43 // pred_check
          %p323 = pneg %p137
        $region62: #{tpu_custom_call.1} parent=43 // pred_check_branch
          %325 = sbr.rel (%p323) target = $region64
        $region63: #{tpu_custom_call.1} parent=43 // pred_region
          %327 = dma.done [#allocation10], 256
        $region64: #{tpu_custom_call.1} parent=43 // pred_fallthru
          _
        %s328 = sand.u32 %s35, 1
        %s329 = scalar_lea.sflag [#allocation4], %s328
        %s330 = sand.u32 %s35, 1
        %s331 = smul.addr %s330, 8
        %s332 = scalar_lea.vmem [#allocation3], %s331
        %p333 = pneg %p48
        %p334 = pneg %p45
        %s335 = sand.u32 %s27, 1
        %s336 = scalar_lea.sflag [#allocation7], %s335
        %s337 = sand.u32 %s61, 1
        %s338 = smul.addr %s337, 8
        %s339 = scalar_lea.vmem [#allocation6], %s338
        %p340 = pneg %p74
        %p341 = pneg %p71
        %p342 = pneg %p95
        %p343 = pneg %p92
        %p344 = pneg %p116
        %p345 = pneg %p113
        %p346 = pneg %p137
        %p347 = pneg %p134
        %p348 = pneg %p158
        %p349 = pneg %p155
        %p350 = pneg %p184
        %p351 = pneg %p181
        %s352 = sand.u32 %s171, 1
        %s353 = scalar_lea.sflag [#allocation5], %s352
        %s354 = sand.u32 %s171, 1
        %s355 = smul.addr %s354, 8
        %s356 = scalar_lea.vmem [#allocation12], %s355
        %v357 = vld [vmem:[%s297] sm:$0xff]
        %v358 = vld [vmem:[%s307] sm:$0xff]
        %360 = vst [vmem:[#allocation1] ss:$2 sm:$0xff] %v357
        %v361 = vld.sshfl [vmem:[#allocation1] sm:$0xff pattern:$0x75316420]
        %v362 = vld.sshfl [vmem:[#allocation1 + $0x8] sm:$0xff pattern:$0x75316420]
        %366 = vst [vmem:[#allocation1] ss:$2 sm:$0xff] %v358
        %v367 = vld.sshfl [vmem:[#allocation1] sm:$0xff pattern:$0x75316420]
        %v368 = vld.sshfl [vmem:[#allocation1 + $0x8] sm:$0xff pattern:$0x75316420]
        %371 = vmatpush.xpose.msra.mxu0 0.0
        %372 = vmatpush.xpose.msra.mxu0 0.0
        %373 = vmatpush.xpose.msra.mxu0 0.0
        %374 = vmatpush.xpose.msra.mxu0 0.0
        %375 = vmatpush.xpose.msra.mxu0 0.0
        %376 = vmatpush.xpose.msra.mxu0 0.0
        %377 = vmatpush.xpose.msra.mxu0 0.0
        %378 = vmatpush.xpose.msra.mxu0 0.0
        %379 = vmatpush.xpose.msra.mxu0 0.0
        %380 = vmatpush.xpose.msra.mxu0 0.0
        %381 = vmatpush.xpose.msra.mxu0 0.0
        %382 = vmatpush.xpose.msra.mxu0 0.0
        %383 = vmatpush.xpose.msra.mxu0 0.0
        %384 = vmatpush.xpose.msra.mxu0 0.0
        %385 = vmatpush.xpose.msra.mxu0 0.0
        %v386 = vand.u32 %v367, 4294901760
        %387 = vmatpush.xpose.msra.mxu0 %v386
        %v388 = vand.u32 %v361, 4294901760
        %v389 = vsub.f32 %v361, %v388
        %v390 = vand.u32 %v389, 4294901760
        %v391 = vsub.f32 %v389, %v390
        %v392 = vand.u32 %v391, 4294901760
        %393 = vmatmul.f32.gmra.mxu0 %v392
        %v394 = vpop.f32.mrf.mxu0
        %v395 = vadd.f32 0.0, %v394
        %396 = vdwg.mxu0
        %397 = vmatpush.xpose.msra.mxu0 0.0
        %398 = vmatpush.xpose.msra.mxu0 0.0
        %399 = vmatpush.xpose.msra.mxu0 0.0
        %400 = vmatpush.xpose.msra.mxu0 0.0
        %401 = vmatpush.xpose.msra.mxu0 0.0
        %402 = vmatpush.xpose.msra.mxu0 0.0
        %403 = vmatpush.xpose.msra.mxu0 0.0
        %404 = vmatpush.xpose.msra.mxu0 0.0
        %405 = vmatpush.xpose.msra.mxu0 0.0
        %406 = vmatpush.xpose.msra.mxu0 0.0
        %407 = vmatpush.xpose.msra.mxu0 0.0
        %408 = vmatpush.xpose.msra.mxu0 0.0
        %409 = vmatpush.xpose.msra.mxu0 0.0
        %410 = vmatpush.xpose.msra.mxu0 0.0
        %411 = vmatpush.xpose.msra.mxu0 0.0
        %v412 = vand.u32 %v367, 4294901760
        %v413 = vsub.f32 %v367, %v412
        %v414 = vand.u32 %v413, 4294901760
        %v415 = vsub.f32 %v413, %v414
        %v416 = vand.u32 %v415, 4294901760
        %417 = vmatpush.xpose.msra.mxu0 %v416
        %v418 = vand.u32 %v361, 4294901760
        %419 = vmatmul.f32.gmra.mxu0 %v418
        %v420 = vpop.f32.mrf.mxu0
        %v421 = vadd.f32 %v395, %v420
        %422 = vdwg.mxu0
        %423 = vmatpush.xpose.msra.mxu0 0.0
        %424 = vmatpush.xpose.msra.mxu0 0.0
        %425 = vmatpush.xpose.msra.mxu0 0.0
        %426 = vmatpush.xpose.msra.mxu0 0.0
        %427 = vmatpush.xpose.msra.mxu0 0.0
        %428 = vmatpush.xpose.msra.mxu0 0.0
        %429 = vmatpush.xpose.msra.mxu0 0.0
        %430 = vmatpush.xpose.msra.mxu0 0.0
        %431 = vmatpush.xpose.msra.mxu0 0.0
        %432 = vmatpush.xpose.msra.mxu0 0.0
        %433 = vmatpush.xpose.msra.mxu0 0.0
        %434 = vmatpush.xpose.msra.mxu0 0.0
        %435 = vmatpush.xpose.msra.mxu0 0.0
        %436 = vmatpush.xpose.msra.mxu0 0.0
        %437 = vmatpush.xpose.msra.mxu0 0.0
        %v438 = vand.u32 %v367, 4294901760
        %v439 = vsub.f32 %v367, %v438
        %440 = vmatpush.xpose.msra.mxu0 %v439
        %v441 = vand.u32 %v361, 4294901760
        %v442 = vsub.f32 %v361, %v441
        %443 = vmatmul.f32.gmra.mxu0 %v442
        %v444 = vpop.f32.mrf.mxu0
        %v445 = vadd.f32 %v421, %v444
        %446 = vdwg.mxu0
        %447 = vmatpush.xpose.msra.mxu0 0.0
        %448 = vmatpush.xpose.msra.mxu0 0.0
        %449 = vmatpush.xpose.msra.mxu0 0.0
        %450 = vmatpush.xpose.msra.mxu0 0.0
        %451 = vmatpush.xpose.msra.mxu0 0.0
        %452 = vmatpush.xpose.msra.mxu0 0.0
        %453 = vmatpush.xpose.msra.mxu0 0.0
        %454 = vmatpush.xpose.msra.mxu0 0.0
        %455 = vmatpush.xpose.msra.mxu0 0.0
        %456 = vmatpush.xpose.msra.mxu0 0.0
        %457 = vmatpush.xpose.msra.mxu0 0.0
        %458 = vmatpush.xpose.msra.mxu0 0.0
        %459 = vmatpush.xpose.msra.mxu0 0.0
        %460 = vmatpush.xpose.msra.mxu0 0.0
        %461 = vmatpush.xpose.msra.mxu0 0.0
        %v462 = vand.u32 %v367, 4294901760
        %463 = vmatpush.xpose.msra.mxu0 %v462
        %v464 = vand.u32 %v361, 4294901760
        %v465 = vsub.f32 %v361, %v464
        %v466 = vand.u32 %v465, 4294901760
        %467 = vmatmul.f32.gmra.mxu0 %v466
        %v468 = vpop.f32.mrf.mxu0
        %v469 = vadd.f32 %v445, %v468
        %470 = vdwg.mxu0
        %471 = vmatpush.xpose.msra.mxu0 0.0
        %472 = vmatpush.xpose.msra.mxu0 0.0
        %473 = vmatpush.xpose.msra.mxu0 0.0
        %474 = vmatpush.xpose.msra.mxu0 0.0
        %475 = vmatpush.xpose.msra.mxu0 0.0
        %476 = vmatpush.xpose.msra.mxu0 0.0
        %477 = vmatpush.xpose.msra.mxu0 0.0
        %478 = vmatpush.xpose.msra.mxu0 0.0
        %479 = vmatpush.xpose.msra.mxu0 0.0
        %480 = vmatpush.xpose.msra.mxu0 0.0
        %481 = vmatpush.xpose.msra.mxu0 0.0
        %482 = vmatpush.xpose.msra.mxu0 0.0
        %483 = vmatpush.xpose.msra.mxu0 0.0
        %484 = vmatpush.xpose.msra.mxu0 0.0
        %485 = vmatpush.xpose.msra.mxu0 0.0
        %v486 = vand.u32 %v367, 4294901760
        %v487 = vsub.f32 %v367, %v486
        %v488 = vand.u32 %v487, 4294901760
        %489 = vmatpush.xpose.msra.mxu0 %v488
        %v490 = vand.u32 %v361, 4294901760
        %491 = vmatmul.f32.gmra.mxu0 %v490
        %v492 = vpop.f32.mrf.mxu0
        %v493 = vadd.f32 %v469, %v492
        %494 = vdwg.mxu0
        %495 = vmatpush.xpose.msra.mxu0 0.0
        %496 = vmatpush.xpose.msra.mxu0 0.0
        %497 = vmatpush.xpose.msra.mxu0 0.0
        %498 = vmatpush.xpose.msra.mxu0 0.0
        %499 = vmatpush.xpose.msra.mxu0 0.0
        %500 = vmatpush.xpose.msra.mxu0 0.0
        %501 = vmatpush.xpose.msra.mxu0 0.0
        %502 = vmatpush.xpose.msra.mxu0 0.0
        %503 = vmatpush.xpose.msra.mxu0 0.0
        %504 = vmatpush.xpose.msra.mxu0 0.0
        %505 = vmatpush.xpose.msra.mxu0 0.0
        %506 = vmatpush.xpose.msra.mxu0 0.0
        %507 = vmatpush.xpose.msra.mxu0 0.0
        %508 = vmatpush.xpose.msra.mxu0 0.0
        %509 = vmatpush.xpose.msra.mxu0 0.0
        %v510 = vand.u32 %v367, 4294901760
        %511 = vmatpush.xpose.msra.mxu0 %v510
        %v512 = vand.u32 %v361, 4294901760
        %513 = vmatmul.f32.gmra.mxu0 %v512
        %v514 = vpop.f32.mrf.mxu0
        %v515 = vadd.f32 %v493, %v514
        %516 = vdwg.mxu0
        %517 = vmatpush.xpose.msra.mxu0 0.0
        %518 = vmatpush.xpose.msra.mxu0 0.0
        %519 = vmatpush.xpose.msra.mxu0 0.0
        %520 = vmatpush.xpose.msra.mxu0 0.0
        %521 = vmatpush.xpose.msra.mxu0 0.0
        %522 = vmatpush.xpose.msra.mxu0 0.0
        %523 = vmatpush.xpose.msra.mxu0 0.0
        %524 = vmatpush.xpose.msra.mxu0 0.0
        %525 = vmatpush.xpose.msra.mxu0 0.0
        %526 = vmatpush.xpose.msra.mxu0 0.0
        %527 = vmatpush.xpose.msra.mxu0 0.0
        %528 = vmatpush.xpose.msra.mxu0 0.0
        %529 = vmatpush.xpose.msra.mxu0 0.0
        %530 = vmatpush.xpose.msra.mxu0 0.0
        %531 = vmatpush.xpose.msra.mxu0 0.0
        %v532 = vand.u32 %v368, 4294901760
        %533 = vmatpush.xpose.msra.mxu0 %v532
        %v534 = vand.u32 %v362, 4294901760
        %v535 = vsub.f32 %v362, %v534
        %v536 = vand.u32 %v535, 4294901760
        %v537 = vsub.f32 %v535, %v536
        %v538 = vand.u32 %v537, 4294901760
        %539 = vmatmul.f32.gmra.mxu0 %v538
        %v540 = vpop.f32.mrf.mxu0
        %v541 = vadd.f32 %v515, %v540
        %542 = vdwg.mxu0
        %543 = vmatpush.xpose.msra.mxu0 0.0
        %544 = vmatpush.xpose.msra.mxu0 0.0
        %545 = vmatpush.xpose.msra.mxu0 0.0
        %546 = vmatpush.xpose.msra.mxu0 0.0
        %547 = vmatpush.xpose.msra.mxu0 0.0
        %548 = vmatpush.xpose.msra.mxu0 0.0
        %549 = vmatpush.xpose.msra.mxu0 0.0
        %550 = vmatpush.xpose.msra.mxu0 0.0
        %551 = vmatpush.xpose.msra.mxu0 0.0
        %552 = vmatpush.xpose.msra.mxu0 0.0
        %553 = vmatpush.xpose.msra.mxu0 0.0
        %554 = vmatpush.xpose.msra.mxu0 0.0
        %555 = vmatpush.xpose.msra.mxu0 0.0
        %556 = vmatpush.xpose.msra.mxu0 0.0
        %557 = vmatpush.xpose.msra.mxu0 0.0
        %v558 = vand.u32 %v368, 4294901760
        %v559 = vsub.f32 %v368, %v558
        %v560 = vand.u32 %v559, 4294901760
        %v561 = vsub.f32 %v559, %v560
        %v562 = vand.u32 %v561, 4294901760
        %563 = vmatpush.xpose.msra.mxu0 %v562
        %v564 = vand.u32 %v362, 4294901760
        %565 = vmatmul.f32.gmra.mxu0 %v564
        %v566 = vpop.f32.mrf.mxu0
        %v567 = vadd.f32 %v541, %v566
        %568 = vdwg.mxu0
        %569 = vmatpush.xpose.msra.mxu0 0.0
        %570 = vmatpush.xpose.msra.mxu0 0.0
        %571 = vmatpush.xpose.msra.mxu0 0.0
        %572 = vmatpush.xpose.msra.mxu0 0.0
        %573 = vmatpush.xpose.msra.mxu0 0.0
        %574 = vmatpush.xpose.msra.mxu0 0.0
        %575 = vmatpush.xpose.msra.mxu0 0.0
        %576 = vmatpush.xpose.msra.mxu0 0.0
        %577 = vmatpush.xpose.msra.mxu0 0.0
        %578 = vmatpush.xpose.msra.mxu0 0.0
        %579 = vmatpush.xpose.msra.mxu0 0.0
        %580 = vmatpush.xpose.msra.mxu0 0.0
        %581 = vmatpush.xpose.msra.mxu0 0.0
        %582 = vmatpush.xpose.msra.mxu0 0.0
        %583 = vmatpush.xpose.msra.mxu0 0.0
        %v584 = vand.u32 %v368, 4294901760
        %v585 = vsub.f32 %v368, %v584
        %586 = vmatpush.xpose.msra.mxu0 %v585
        %v587 = vand.u32 %v362, 4294901760
        %v588 = vsub.f32 %v362, %v587
        %589 = vmatmul.f32.gmra.mxu0 %v588
        %v590 = vpop.f32.mrf.mxu0
        %v591 = vadd.f32 %v567, %v590
        %592 = vdwg.mxu0
        %593 = vmatpush.xpose.msra.mxu0 0.0
        %594 = vmatpush.xpose.msra.mxu0 0.0
        %595 = vmatpush.xpose.msra.mxu0 0.0
        %596 = vmatpush.xpose.msra.mxu0 0.0
        %597 = vmatpush.xpose.msra.mxu0 0.0
        %598 = vmatpush.xpose.msra.mxu0 0.0
        %599 = vmatpush.xpose.msra.mxu0 0.0
        %600 = vmatpush.xpose.msra.mxu0 0.0
        %601 = vmatpush.xpose.msra.mxu0 0.0
        %602 = vmatpush.xpose.msra.mxu0 0.0
        %603 = vmatpush.xpose.msra.mxu0 0.0
        %604 = vmatpush.xpose.msra.mxu0 0.0
        %605 = vmatpush.xpose.msra.mxu0 0.0
        %606 = vmatpush.xpose.msra.mxu0 0.0
        %607 = vmatpush.xpose.msra.mxu0 0.0
        %v608 = vand.u32 %v368, 4294901760
        %609 = vmatpush.xpose.msra.mxu0 %v608
        %v610 = vand.u32 %v362, 4294901760
        %v611 = vsub.f32 %v362, %v610
        %v612 = vand.u32 %v611, 4294901760
        %613 = vmatmul.f32.gmra.mxu0 %v612
        %v614 = vpop.f32.mrf.mxu0
        %v615 = vadd.f32 %v591, %v614
        %616 = vdwg.mxu0
        %617 = vmatpush.xpose.msra.mxu0 0.0
        %618 = vmatpush.xpose.msra.mxu0 0.0
        %619 = vmatpush.xpose.msra.mxu0 0.0
        %620 = vmatpush.xpose.msra.mxu0 0.0
        %621 = vmatpush.xpose.msra.mxu0 0.0
        %622 = vmatpush.xpose.msra.mxu0 0.0
        %623 = vmatpush.xpose.msra.mxu0 0.0
        %624 = vmatpush.xpose.msra.mxu0 0.0
        %625 = vmatpush.xpose.msra.mxu0 0.0
        %626 = vmatpush.xpose.msra.mxu0 0.0
        %627 = vmatpush.xpose.msra.mxu0 0.0
        %628 = vmatpush.xpose.msra.mxu0 0.0
        %629 = vmatpush.xpose.msra.mxu0 0.0
        %630 = vmatpush.xpose.msra.mxu0 0.0
        %631 = vmatpush.xpose.msra.mxu0 0.0
        %v632 = vand.u32 %v368, 4294901760
        %v633 = vsub.f32 %v368, %v632
        %v634 = vand.u32 %v633, 4294901760
        %635 = vmatpush.xpose.msra.mxu0 %v634
        %v636 = vand.u32 %v362, 4294901760
        %637 = vmatmul.f32.gmra.mxu0 %v636
        %v638 = vpop.f32.mrf.mxu0
        %v639 = vadd.f32 %v615, %v638
        %640 = vdwg.mxu0
        %641 = vmatpush.xpose.msra.mxu0 0.0
        %642 = vmatpush.xpose.msra.mxu0 0.0
        %643 = vmatpush.xpose.msra.mxu0 0.0
        %644 = vmatpush.xpose.msra.mxu0 0.0
        %645 = vmatpush.xpose.msra.mxu0 0.0
        %646 = vmatpush.xpose.msra.mxu0 0.0
        %647 = vmatpush.xpose.msra.mxu0 0.0
        %648 = vmatpush.xpose.msra.mxu0 0.0
        %649 = vmatpush.xpose.msra.mxu0 0.0
        %650 = vmatpush.xpose.msra.mxu0 0.0
        %651 = vmatpush.xpose.msra.mxu0 0.0
        %652 = vmatpush.xpose.msra.mxu0 0.0
        %653 = vmatpush.xpose.msra.mxu0 0.0
        %654 = vmatpush.xpose.msra.mxu0 0.0
        %655 = vmatpush.xpose.msra.mxu0 0.0
        %v656 = vand.u32 %v368, 4294901760
        %657 = vmatpush.xpose.msra.mxu0 %v656
        %v658 = vand.u32 %v362, 4294901760
        %659 = vmatmul.f32.gmra.mxu0 %v658
        %v660 = vpop.f32.mrf.mxu0
        %v661 = vadd.f32 %v639, %v660
        %662 = vdwg.mxu0
        %v663 = vmul.f32 %v358, %v358
        %665 = vst [vmem:[#allocation1] ss:$2 sm:$0xff] %v663
        %v666 = vld.sshfl [vmem:[#allocation1] sm:$0xff pattern:$0x75316420]
        %v667 = vld.sshfl [vmem:[#allocation1 + $0x8] sm:$0xff pattern:$0x75316420]
        %670 = vmatpush.xpose.msra.mxu0 0.0
        %671 = vmatpush.xpose.msra.mxu0 0.0
        %672 = vmatpush.xpose.msra.mxu0 0.0
        %673 = vmatpush.xpose.msra.mxu0 0.0
        %674 = vmatpush.xpose.msra.mxu0 0.0
        %675 = vmatpush.xpose.msra.mxu0 0.0
        %676 = vmatpush.xpose.msra.mxu0 0.0
        %677 = vmatpush.xpose.msra.mxu0 0.0
        %678 = vmatpush.xpose.msra.mxu0 0.0
        %679 = vmatpush.xpose.msra.mxu0 0.0
        %680 = vmatpush.xpose.msra.mxu0 0.0
        %681 = vmatpush.xpose.msra.mxu0 0.0
        %682 = vmatpush.xpose.msra.mxu0 0.0
        %683 = vmatpush.xpose.msra.mxu0 0.0
        %684 = vmatpush.xpose.msra.mxu0 0.0
        %v685 = vand.u32 %v666, 4294901760
        %686 = vmatpush.xpose.msra.mxu0 %v685
        %687 = vmatmul.f32.gmra.mxu0 0.0
        %v688 = vpop.f32.mrf.mxu0
        %v689 = vadd.f32 0.0, %v688
        %690 = vdwg.mxu0
        %691 = vmatpush.xpose.msra.mxu0 0.0
        %692 = vmatpush.xpose.msra.mxu0 0.0
        %693 = vmatpush.xpose.msra.mxu0 0.0
        %694 = vmatpush.xpose.msra.mxu0 0.0
        %695 = vmatpush.xpose.msra.mxu0 0.0
        %696 = vmatpush.xpose.msra.mxu0 0.0
        %697 = vmatpush.xpose.msra.mxu0 0.0
        %698 = vmatpush.xpose.msra.mxu0 0.0
        %699 = vmatpush.xpose.msra.mxu0 0.0
        %700 = vmatpush.xpose.msra.mxu0 0.0
        %701 = vmatpush.xpose.msra.mxu0 0.0
        %702 = vmatpush.xpose.msra.mxu0 0.0
        %703 = vmatpush.xpose.msra.mxu0 0.0
        %704 = vmatpush.xpose.msra.mxu0 0.0
        %705 = vmatpush.xpose.msra.mxu0 0.0
        %v706 = vand.u32 %v666, 4294901760
        %v707 = vsub.f32 %v666, %v706
        %v708 = vand.u32 %v707, 4294901760
        %v709 = vsub.f32 %v707, %v708
        %v710 = vand.u32 %v709, 4294901760
        %711 = vmatpush.xpose.msra.mxu0 %v710
        %712 = vmatmul.f32.gmra.mxu0 1.0
        %v713 = vpop.f32.mrf.mxu0
        %v714 = vadd.f32 %v689, %v713
        %715 = vdwg.mxu0
        %716 = vmatpush.xpose.msra.mxu0 0.0
        %717 = vmatpush.xpose.msra.mxu0 0.0
        %718 = vmatpush.xpose.msra.mxu0 0.0
        %719 = vmatpush.xpose.msra.mxu0 0.0
        %720 = vmatpush.xpose.msra.mxu0 0.0
        %721 = vmatpush.xpose.msra.mxu0 0.0
        %722 = vmatpush.xpose.msra.mxu0 0.0
        %723 = vmatpush.xpose.msra.mxu0 0.0
        %724 = vmatpush.xpose.msra.mxu0 0.0
        %725 = vmatpush.xpose.msra.mxu0 0.0
        %726 = vmatpush.xpose.msra.mxu0 0.0
        %727 = vmatpush.xpose.msra.mxu0 0.0
        %728 = vmatpush.xpose.msra.mxu0 0.0
        %729 = vmatpush.xpose.msra.mxu0 0.0
        %730 = vmatpush.xpose.msra.mxu0 0.0
        %v731 = vand.u32 %v666, 4294901760
        %v732 = vsub.f32 %v666, %v731
        %733 = vmatpush.xpose.msra.mxu0 %v732
        %734 = vmatmul.f32.gmra.mxu0 0.0
        %v735 = vpop.f32.mrf.mxu0
        %v736 = vadd.f32 %v714, %v735
        %737 = vdwg.mxu0
        %738 = vmatpush.xpose.msra.mxu0 0.0
        %739 = vmatpush.xpose.msra.mxu0 0.0
        %740 = vmatpush.xpose.msra.mxu0 0.0
        %741 = vmatpush.xpose.msra.mxu0 0.0
        %742 = vmatpush.xpose.msra.mxu0 0.0
        %743 = vmatpush.xpose.msra.mxu0 0.0
        %744 = vmatpush.xpose.msra.mxu0 0.0
        %745 = vmatpush.xpose.msra.mxu0 0.0
        %746 = vmatpush.xpose.msra.mxu0 0.0
        %747 = vmatpush.xpose.msra.mxu0 0.0
        %748 = vmatpush.xpose.msra.mxu0 0.0
        %749 = vmatpush.xpose.msra.mxu0 0.0
        %750 = vmatpush.xpose.msra.mxu0 0.0
        %751 = vmatpush.xpose.msra.mxu0 0.0
        %752 = vmatpush.xpose.msra.mxu0 0.0
        %v753 = vand.u32 %v666, 4294901760
        %754 = vmatpush.xpose.msra.mxu0 %v753
        %755 = vmatmul.f32.gmra.mxu0 0.0
        %v756 = vpop.f32.mrf.mxu0
        %v757 = vadd.f32 %v736, %v756
        %758 = vdwg.mxu0
        %759 = vmatpush.xpose.msra.mxu0 0.0
        %760 = vmatpush.xpose.msra.mxu0 0.0
        %761 = vmatpush.xpose.msra.mxu0 0.0
        %762 = vmatpush.xpose.msra.mxu0 0.0
        %763 = vmatpush.xpose.msra.mxu0 0.0
        %764 = vmatpush.xpose.msra.mxu0 0.0
        %765 = vmatpush.xpose.msra.mxu0 0.0
        %766 = vmatpush.xpose.msra.mxu0 0.0
        %767 = vmatpush.xpose.msra.mxu0 0.0
        %768 = vmatpush.xpose.msra.mxu0 0.0
        %769 = vmatpush.xpose.msra.mxu0 0.0
        %770 = vmatpush.xpose.msra.mxu0 0.0
        %771 = vmatpush.xpose.msra.mxu0 0.0
        %772 = vmatpush.xpose.msra.mxu0 0.0
        %773 = vmatpush.xpose.msra.mxu0 0.0
        %v774 = vand.u32 %v666, 4294901760
        %v775 = vsub.f32 %v666, %v774
        %v776 = vand.u32 %v775, 4294901760
        %777 = vmatpush.xpose.msra.mxu0 %v776
        %778 = vmatmul.f32.gmra.mxu0 1.0
        %v779 = vpop.f32.mrf.mxu0
        %v780 = vadd.f32 %v757, %v779
        %781 = vdwg.mxu0
        %782 = vmatpush.xpose.msra.mxu0 0.0
        %783 = vmatpush.xpose.msra.mxu0 0.0
        %784 = vmatpush.xpose.msra.mxu0 0.0
        %785 = vmatpush.xpose.msra.mxu0 0.0
        %786 = vmatpush.xpose.msra.mxu0 0.0
        %787 = vmatpush.xpose.msra.mxu0 0.0
        %788 = vmatpush.xpose.msra.mxu0 0.0
        %789 = vmatpush.xpose.msra.mxu0 0.0
        %790 = vmatpush.xpose.msra.mxu0 0.0
        %791 = vmatpush.xpose.msra.mxu0 0.0
        %792 = vmatpush.xpose.msra.mxu0 0.0
        %793 = vmatpush.xpose.msra.mxu0 0.0
        %794 = vmatpush.xpose.msra.mxu0 0.0
        %795 = vmatpush.xpose.msra.mxu0 0.0
        %796 = vmatpush.xpose.msra.mxu0 0.0
        %v797 = vand.u32 %v666, 4294901760
        %798 = vmatpush.xpose.msra.mxu0 %v797
        %799 = vmatmul.f32.gmra.mxu0 1.0
        %v800 = vpop.f32.mrf.mxu0
        %v801 = vadd.f32 %v780, %v800
        %802 = vdwg.mxu0
        %803 = vmatpush.xpose.msra.mxu0 0.0
        %804 = vmatpush.xpose.msra.mxu0 0.0
        %805 = vmatpush.xpose.msra.mxu0 0.0
        %806 = vmatpush.xpose.msra.mxu0 0.0
        %807 = vmatpush.xpose.msra.mxu0 0.0
        %808 = vmatpush.xpose.msra.mxu0 0.0
        %809 = vmatpush.xpose.msra.mxu0 0.0
        %810 = vmatpush.xpose.msra.mxu0 0.0
        %811 = vmatpush.xpose.msra.mxu0 0.0
        %812 = vmatpush.xpose.msra.mxu0 0.0
        %813 = vmatpush.xpose.msra.mxu0 0.0
        %814 = vmatpush.xpose.msra.mxu0 0.0
        %815 = vmatpush.xpose.msra.mxu0 0.0
        %816 = vmatpush.xpose.msra.mxu0 0.0
        %817 = vmatpush.xpose.msra.mxu0 0.0
        %v818 = vand.u32 %v667, 4294901760
        %819 = vmatpush.xpose.msra.mxu0 %v818
        %820 = vmatmul.f32.gmra.mxu0 0.0
        %v821 = vpop.f32.mrf.mxu0
        %v822 = vadd.f32 %v801, %v821
        %823 = vdwg.mxu0
        %824 = vmatpush.xpose.msra.mxu0 0.0
        %825 = vmatpush.xpose.msra.mxu0 0.0
        %826 = vmatpush.xpose.msra.mxu0 0.0
        %827 = vmatpush.xpose.msra.mxu0 0.0
        %828 = vmatpush.xpose.msra.mxu0 0.0
        %829 = vmatpush.xpose.msra.mxu0 0.0
        %830 = vmatpush.xpose.msra.mxu0 0.0
        %831 = vmatpush.xpose.msra.mxu0 0.0
        %832 = vmatpush.xpose.msra.mxu0 0.0
        %833 = vmatpush.xpose.msra.mxu0 0.0
        %834 = vmatpush.xpose.msra.mxu0 0.0
        %835 = vmatpush.xpose.msra.mxu0 0.0
        %836 = vmatpush.xpose.msra.mxu0 0.0
        %837 = vmatpush.xpose.msra.mxu0 0.0
        %838 = vmatpush.xpose.msra.mxu0 0.0
        %v839 = vand.u32 %v667, 4294901760
        %v840 = vsub.f32 %v667, %v839
        %v841 = vand.u32 %v840, 4294901760
        %v842 = vsub.f32 %v840, %v841
        %v843 = vand.u32 %v842, 4294901760
        %844 = vmatpush.xpose.msra.mxu0 %v843
        %845 = vmatmul.f32.gmra.mxu0 1.0
        %v846 = vpop.f32.mrf.mxu0
        %v847 = vadd.f32 %v822, %v846
        %848 = vdwg.mxu0
        %849 = vmatpush.xpose.msra.mxu0 0.0
        %850 = vmatpush.xpose.msra.mxu0 0.0
        %851 = vmatpush.xpose.msra.mxu0 0.0
        %852 = vmatpush.xpose.msra.mxu0 0.0
        %853 = vmatpush.xpose.msra.mxu0 0.0
        %854 = vmatpush.xpose.msra.mxu0 0.0
        %855 = vmatpush.xpose.msra.mxu0 0.0
        %856 = vmatpush.xpose.msra.mxu0 0.0
        %857 = vmatpush.xpose.msra.mxu0 0.0
        %858 = vmatpush.xpose.msra.mxu0 0.0
        %859 = vmatpush.xpose.msra.mxu0 0.0
        %860 = vmatpush.xpose.msra.mxu0 0.0
        %861 = vmatpush.xpose.msra.mxu0 0.0
        %862 = vmatpush.xpose.msra.mxu0 0.0
        %863 = vmatpush.xpose.msra.mxu0 0.0
        %v864 = vand.u32 %v667, 4294901760
        %v865 = vsub.f32 %v667, %v864
        %866 = vmatpush.xpose.msra.mxu0 %v865
        %867 = vmatmul.f32.gmra.mxu0 0.0
        %v868 = vpop.f32.mrf.mxu0
        %v869 = vadd.f32 %v847, %v868
        %870 = vdwg.mxu0
        %871 = vmatpush.xpose.msra.mxu0 0.0
        %872 = vmatpush.xpose.msra.mxu0 0.0
        %873 = vmatpush.xpose.msra.mxu0 0.0
        %874 = vmatpush.xpose.msra.mxu0 0.0
        %875 = vmatpush.xpose.msra.mxu0 0.0
        %876 = vmatpush.xpose.msra.mxu0 0.0
        %877 = vmatpush.xpose.msra.mxu0 0.0
        %878 = vmatpush.xpose.msra.mxu0 0.0
        %879 = vmatpush.xpose.msra.mxu0 0.0
        %880 = vmatpush.xpose.msra.mxu0 0.0
        %881 = vmatpush.xpose.msra.mxu0 0.0
        %882 = vmatpush.xpose.msra.mxu0 0.0
        %883 = vmatpush.xpose.msra.mxu0 0.0
        %884 = vmatpush.xpose.msra.mxu0 0.0
        %885 = vmatpush.xpose.msra.mxu0 0.0
        %v886 = vand.u32 %v667, 4294901760
        %887 = vmatpush.xpose.msra.mxu0 %v886
        %888 = vmatmul.f32.gmra.mxu0 0.0
        %v889 = vpop.f32.mrf.mxu0
        %v890 = vadd.f32 %v869, %v889
        %891 = vdwg.mxu0
        %892 = vmatpush.xpose.msra.mxu0 0.0
        %893 = vmatpush.xpose.msra.mxu0 0.0
        %894 = vmatpush.xpose.msra.mxu0 0.0
        %895 = vmatpush.xpose.msra.mxu0 0.0
        %896 = vmatpush.xpose.msra.mxu0 0.0
        %897 = vmatpush.xpose.msra.mxu0 0.0
        %898 = vmatpush.xpose.msra.mxu0 0.0
        %899 = vmatpush.xpose.msra.mxu0 0.0
        %900 = vmatpush.xpose.msra.mxu0 0.0
        %901 = vmatpush.xpose.msra.mxu0 0.0
        %902 = vmatpush.xpose.msra.mxu0 0.0
        %903 = vmatpush.xpose.msra.mxu0 0.0
        %904 = vmatpush.xpose.msra.mxu0 0.0
        %905 = vmatpush.xpose.msra.mxu0 0.0
        %906 = vmatpush.xpose.msra.mxu0 0.0
        %v907 = vand.u32 %v667, 4294901760
        %v908 = vsub.f32 %v667, %v907
        %v909 = vand.u32 %v908, 4294901760
        %910 = vmatpush.xpose.msra.mxu0 %v909
        %911 = vmatmul.f32.gmra.mxu0 1.0
        %v912 = vpop.f32.mrf.mxu0
        %v913 = vadd.f32 %v890, %v912
        %914 = vdwg.mxu0
        %915 = vmatpush.xpose.msra.mxu0 0.0
        %916 = vmatpush.xpose.msra.mxu0 0.0
        %917 = vmatpush.xpose.msra.mxu0 0.0
        %918 = vmatpush.xpose.msra.mxu0 0.0
        %919 = vmatpush.xpose.msra.mxu0 0.0
        %920 = vmatpush.xpose.msra.mxu0 0.0
        %921 = vmatpush.xpose.msra.mxu0 0.0
        %922 = vmatpush.xpose.msra.mxu0 0.0
        %923 = vmatpush.xpose.msra.mxu0 0.0
        %924 = vmatpush.xpose.msra.mxu0 0.0
        %925 = vmatpush.xpose.msra.mxu0 0.0
        %926 = vmatpush.xpose.msra.mxu0 0.0
        %927 = vmatpush.xpose.msra.mxu0 0.0
        %928 = vmatpush.xpose.msra.mxu0 0.0
        %929 = vmatpush.xpose.msra.mxu0 0.0
        %v930 = vand.u32 %v667, 4294901760
        %931 = vmatpush.xpose.msra.mxu0 %v930
        %932 = vmatmul.f32.gmra.mxu0 1.0
        %v933 = vpop.f32.mrf.mxu0
        %v934 = vadd.f32 %v913, %v933
        %935 = vdwg.mxu0
        %v936 = vmul.f32 %v661, 2.0
        %v937 = vperm.slane %v934, 0
        %v938 = vsub.f32 %v937, %v936
        %vm939 = vcmask 27648
        %v940 = vsel %vm939, %v938, inf
        %941 = vmin.xlane.f32.xlu0 %v940
        %v942 = vpop.xlane.xlu0 %941
        %v943 = vlaneseq
        %v944 = vand.u32 %v943, 127
        %v945 = vcvt.s32.f32 %v944
        %vm946 = vcmp.le.f32.partialorder %v938, %v942
        %v947 = vsel %vm946, %v945, 4.0
        %v948 = vsel %vm939, %v947, inf
        %949 = vmin.xlane.f32.xlu0 %v948
        %v950 = vpop.xlane.xlu0 %949
        %vm951 = vcmp.eq.f32.partialorder %v945, %v950
        %v952 = vsel %vm951, 1, 0
        %v953 = vcvt.s32.f32 %v952
        %954 = vst [vmem:[#allocation1] ss:$2 sm:$0xff] %v358
        %v955 = vld.sshfl [vmem:[#allocation1] sm:$0xff pattern:$0x75316420]
        %v956 = vld.sshfl [vmem:[#allocation1 + $0x8] sm:$0xff pattern:$0x75316420]
        %vm957 = vcmask 31744
        %v959 = vsel %vm957, %v953, 0
        %vm961 = vcmask 1043456
        %v962 = vsel %vm961, %v955, 0
        %v964 = vsel %vm961, %v956, 0
        %966 = vmatpush.msra.mxu0 0.0
        %967 = vmatpush.msra.mxu0 0.0
        %968 = vmatpush.msra.mxu0 0.0
        %969 = vmatpush.msra.mxu0 0.0
        %970 = vmatpush.msra.mxu0 0.0
        %971 = vmatpush.msra.mxu0 0.0
        %972 = vmatpush.msra.mxu0 0.0
        %973 = vmatpush.msra.mxu0 0.0
        %974 = vmatpush.msra.mxu0 0.0
        %975 = vmatpush.msra.mxu0 0.0
        %976 = vmatpush.msra.mxu0 0.0
        %977 = vmatpush.msra.mxu0 0.0
        %978 = vmatpush.msra.mxu0 0.0
        %979 = vmatpush.msra.mxu0 0.0
        %980 = vmatpush.msra.mxu0 0.0
        %981 = vmatpush.msra.mxu0 %v962
        %982 = vmatmul.f32.gmra.mxu0 %v959
        %v983 = vpop.f32.mrf.mxu0
        %v984 = vadd.f32 0.0, %v983
        %985 = vdwg.mxu0
        %986 = vmatpush.msra.mxu0 0.0
        %987 = vmatpush.msra.mxu0 0.0
        %988 = vmatpush.msra.mxu0 0.0
        %989 = vmatpush.msra.mxu0 0.0
        %990 = vmatpush.msra.mxu0 0.0
        %991 = vmatpush.msra.mxu0 0.0
        %992 = vmatpush.msra.mxu0 0.0
        %993 = vmatpush.msra.mxu0 0.0
        %994 = vmatpush.msra.mxu0 0.0
        %995 = vmatpush.msra.mxu0 0.0
        %996 = vmatpush.msra.mxu0 0.0
        %997 = vmatpush.msra.mxu0 0.0
        %998 = vmatpush.msra.mxu0 0.0
        %999 = vmatpush.msra.mxu0 0.0
        %1000 = vmatpush.msra.mxu0 0.0
        %1001 = vmatpush.msra.mxu0 %v964
        %1002 = vmatmul.f32.gmra.mxu0 %v959
        %v1003 = vpop.f32.mrf.mxu0
        %v1004 = vadd.f32 0.0, %v1003
        %1005 = vdwg.mxu0
        %v1006 = vld [vmem:[#allocation8] sm:$0xff]
        %v1007 = vld [vmem:[#allocation8 + $0x8] sm:$0xff]
        %v1008 = vld [vmem:[#allocation8 + $0x10] sm:$0x1]
        %v1009 = vld [vmem:[#allocation8 + $0x18] sm:$0x1]
        %1010 = vst [vmem:[#allocation1] ss:$2 sm:$0xff] %v357
        %v1011 = vld.sshfl [vmem:[#allocation1] sm:$0xff pattern:$0x75316420]
        %v1012 = vld.sshfl [vmem:[#allocation1 + $0x8] sm:$0xff pattern:$0x75316420]
        %1015 = vrot.lane.b32.xlu0 %v1011, 17
        %v1016 = vpop.permute.xlu0 %1015
        %1017 = vrot.lane.b32.xlu0 %v1012, 17
        %v1018 = vpop.permute.xlu0 %1017
        %vm1019 = vcmp.lt.s32.totalorder %v944, 17
        %v1020 = vsel %vm1019, %v1016, %v1018
        %v1021 = vsel %vm1019, %v1018, %v1016
        %v1022 = vperm.slane %v1006, 0
        %v1023 = vperm.slane %v1007, 0
        %v1024 = vmul.f32 %v1021, %v1022
        %v1025 = vmul.f32 %v1020, %v1023
        %1026 = vst [vmem:[#allocation2] sm:$0xf] %v1024
        %1027 = vst [vmem:[#allocation2 + $0x8] sm:$0xf] %v1025
        %1028 = vrot.lane.b32.xlu0 %v984, 17
        %v1029 = vpop.permute.xlu0 %1028
        %1030 = vrot.lane.b32.xlu0 %v1004, 17
        %v1031 = vpop.permute.xlu0 %1030
        %v1032 = vsel %vm1019, %v1029, %v1031
        %v1033 = vsel %vm1019, %v1031, %v1029
        %v1034 = vmul.f32 %v1033, %v1022
        %v1035 = vmul.f32 %v1032, %v1023
        %v1038 = vrot.slane %v1034, 4
        %v1039 = vrot.slane %v1035, 4
        %1042 = vst [vmem:[#allocation2] sm:$0xf0] %v1038
        %1043 = vst [vmem:[#allocation2 + $0x8] sm:$0xf0] %v1039
        %1044 = vst [vmem:[#allocation1] ss:$2 sm:$0xff] %v357
        %v1045 = vld.sshfl [vmem:[#allocation1] sm:$0xff pattern:$0x75316420]
        %v1046 = vld.sshfl [vmem:[#allocation1 + $0x8] sm:$0xff pattern:$0x75316420]
        %1049 = vrot.lane.b32.xlu0 %v1045, 16
        %v1050 = vpop.permute.xlu0 %1049
        %1051 = vrot.lane.b32.xlu0 %v1046, 16
        %v1052 = vpop.permute.xlu0 %1051
        %vm1053 = vcmp.lt.s32.totalorder %v944, 16
        %v1054 = vsel %vm1053, %v1050, %v1052
        %v1055 = vsel %vm1053, %v1052, %v1050
        %v1056 = vperm.slane %v1006, 1
        %v1057 = vperm.slane %v1007, 1
        %v1058 = vmul.f32 %v1055, %v1056
        %v1059 = vmul.f32 %v1054, %v1057
        %1060 = vst [vmem:[#allocation2 + $0x10] sm:$0xf] %v1058
        %1061 = vst [vmem:[#allocation2 + $0x18] sm:$0xf] %v1059
        %1062 = vrot.lane.b32.xlu0 %v984, 16
        %v1063 = vpop.permute.xlu0 %1062
        %1064 = vrot.lane.b32.xlu0 %v1004, 16
        %v1065 = vpop.permute.xlu0 %1064
        %v1066 = vsel %vm1053, %v1063, %v1065
        %v1067 = vsel %vm1053, %v1065, %v1063
        %v1068 = vmul.f32 %v1067, %v1056
        %v1069 = vmul.f32 %v1066, %v1057
        %v1072 = vrot.slane %v1068, 4
        %v1073 = vrot.slane %v1069, 4
        %1076 = vst [vmem:[#allocation2 + $0x10] sm:$0xf0] %v1072
        %1077 = vst [vmem:[#allocation2 + $0x18] sm:$0xf0] %v1073
        %1078 = vst [vmem:[#allocation1] ss:$2 sm:$0xff] %v357
        %v1079 = vld.sshfl [vmem:[#allocation1] sm:$0xff pattern:$0x75316420]
        %v1080 = vld.sshfl [vmem:[#allocation1 + $0x8] sm:$0xff pattern:$0x75316420]
        %1083 = vrot.lane.b32.xlu0 %v1079, 15
        %v1084 = vpop.permute.xlu0 %1083
        %1085 = vrot.lane.b32.xlu0 %v1080, 15
        %v1086 = vpop.permute.xlu0 %1085
        %vm1087 = vcmp.lt.s32.totalorder %v944, 15
        %v1088 = vsel %vm1087, %v1084, %v1086
        %v1089 = vsel %vm1087, %v1086, %v1084
        %v1090 = vperm.slane %v1006, 2
        %v1091 = vperm.slane %v1007, 2
        %v1092 = vmul.f32 %v1089, %v1090
        %v1093 = vmul.f32 %v1088, %v1091
        %1094 = vst [vmem:[#allocation2 + $0x20] sm:$0xf] %v1092
        %1095 = vst [vmem:[#allocation2 + $0x28] sm:$0xf] %v1093
        %1096 = vrot.lane.b32.xlu0 %v984, 15
        %v1097 = vpop.permute.xlu0 %1096
        %1098 = vrot.lane.b32.xlu0 %v1004, 15
        %v1099 = vpop.permute.xlu0 %1098
        %v1100 = vsel %vm1087, %v1097, %v1099
        %v1101 = vsel %vm1087, %v1099, %v1097
        %v1102 = vmul.f32 %v1101, %v1090
        %v1103 = vmul.f32 %v1100, %v1091
        %v1106 = vrot.slane %v1102, 4
        %v1107 = vrot.slane %v1103, 4
        %1110 = vst [vmem:[#allocation2 + $0x20] sm:$0xf0] %v1106
        %1111 = vst [vmem:[#allocation2 + $0x28] sm:$0xf0] %v1107
        %1112 = vst [vmem:[#allocation1] ss:$2 sm:$0xff] %v357
        %v1113 = vld.sshfl [vmem:[#allocation1] sm:$0xff pattern:$0x75316420]
        %v1114 = vld.sshfl [vmem:[#allocation1 + $0x8] sm:$0xff pattern:$0x75316420]
        %1117 = vrot.lane.b32.xlu0 %v1113, 1
        %v1118 = vpop.permute.xlu0 %1117
        %1119 = vrot.lane.b32.xlu0 %v1114, 1
        %v1120 = vpop.permute.xlu0 %1119
        %vm1121 = vcmp.lt.s32.totalorder %v944, 1
        %v1122 = vsel %vm1121, %v1118, %v1120
        %v1123 = vsel %vm1121, %v1120, %v1118
        %v1124 = vperm.slane %v1006, 3
        %v1125 = vperm.slane %v1007, 3
        %v1126 = vmul.f32 %v1123, %v1124
        %v1127 = vmul.f32 %v1122, %v1125
        %1128 = vst [vmem:[#allocation2 + $0x30] sm:$0xf] %v1126
        %1129 = vst [vmem:[#allocation2 + $0x38] sm:$0xf] %v1127
        %1130 = vrot.lane.b32.xlu0 %v984, 1
        %v1131 = vpop.permute.xlu0 %1130
        %1132 = vrot.lane.b32.xlu0 %v1004, 1
        %v1133 = vpop.permute.xlu0 %1132
        %v1134 = vsel %vm1121, %v1131, %v1133
        %v1135 = vsel %vm1121, %v1133, %v1131
        %v1136 = vmul.f32 %v1135, %v1124
        %v1137 = vmul.f32 %v1134, %v1125
        %v1140 = vrot.slane %v1136, 4
        %v1141 = vrot.slane %v1137, 4
        %1144 = vst [vmem:[#allocation2 + $0x30] sm:$0xf0] %v1140
        %1145 = vst [vmem:[#allocation2 + $0x38] sm:$0xf0] %v1141
        %1146 = vst [vmem:[#allocation1] ss:$2 sm:$0xff] %v357
        %v1147 = vld.sshfl [vmem:[#allocation1] sm:$0xff pattern:$0x75316420]
        %v1148 = vld.sshfl [vmem:[#allocation1 + $0x8] sm:$0xff pattern:$0x75316420]
        %1151 = vst [vmem:[#allocation2 + $0x40] sm:$0xf] %v1147
        %1152 = vst [vmem:[#allocation2 + $0x48] sm:$0xf] %v1148
        %v1155 = vrot.slane %v984, 4
        %v1156 = vrot.slane %v1004, 4
        %1159 = vst [vmem:[#allocation2 + $0x40] sm:$0xf0] %v1155
        %1160 = vst [vmem:[#allocation2 + $0x48] sm:$0xf0] %v1156
        %1161 = vst [vmem:[#allocation1] ss:$2 sm:$0xff] %v357
        %v1162 = vld.sshfl [vmem:[#allocation1] sm:$0xff pattern:$0x75316420]
        %v1163 = vld.sshfl [vmem:[#allocation1 + $0x8] sm:$0xff pattern:$0x75316420]
        %1166 = vrot.lane.b32.xlu0 %v1162, 127
        %v1167 = vpop.permute.xlu0 %1166
        %1168 = vrot.lane.b32.xlu0 %v1163, 127
        %v1169 = vpop.permute.xlu0 %1168
        %vm1170 = vcmp.lt.s32.totalorder %v944, 127
        %v1171 = vsel %vm1170, %v1167, %v1169
        %v1172 = vsel %vm1170, %v1169, %v1167
        %v1173 = vperm.slane %v1006, 5
        %v1174 = vperm.slane %v1007, 5
        %v1175 = vmul.f32 %v1171, %v1173
        %v1176 = vmul.f32 %v1172, %v1174
        %1177 = vst [vmem:[#allocation2 + $0x50] sm:$0xf] %v1175
        %1178 = vst [vmem:[#allocation2 + $0x58] sm:$0xf] %v1176
        %1179 = vrot.lane.b32.xlu0 %v984, 127
        %v1180 = vpop.permute.xlu0 %1179
        %1181 = vrot.lane.b32.xlu0 %v1004, 127
        %v1182 = vpop.permute.xlu0 %1181
        %v1183 = vsel %vm1170, %v1180, %v1182
        %v1184 = vsel %vm1170, %v1182, %v1180
        %v1185 = vmul.f32 %v1183, %v1173
        %v1186 = vmul.f32 %v1184, %v1174
        %v1189 = vrot.slane %v1185, 4
        %v1190 = vrot.slane %v1186, 4
        %1193 = vst [vmem:[#allocation2 + $0x50] sm:$0xf0] %v1189
        %1194 = vst [vmem:[#allocation2 + $0x58] sm:$0xf0] %v1190
        %1195 = vst [vmem:[#allocation1] ss:$2 sm:$0xff] %v357
        %v1196 = vld.sshfl [vmem:[#allocation1] sm:$0xff pattern:$0x75316420]
        %v1197 = vld.sshfl [vmem:[#allocation1 + $0x8] sm:$0xff pattern:$0x75316420]
        %1200 = vrot.lane.b32.xlu0 %v1196, 113
        %v1201 = vpop.permute.xlu0 %1200
        %1202 = vrot.lane.b32.xlu0 %v1197, 113
        %v1203 = vpop.permute.xlu0 %1202
        %vm1204 = vcmp.lt.s32.totalorder %v944, 113
        %v1205 = vsel %vm1204, %v1201, %v1203
        %v1206 = vsel %vm1204, %v1203, %v1201
        %v1207 = vperm.slane %v1006, 6
        %v1208 = vperm.slane %v1007, 6
        %v1209 = vmul.f32 %v1205, %v1207
        %v1210 = vmul.f32 %v1206, %v1208
        %1211 = vst [vmem:[#allocation2 + $0x60] sm:$0xf] %v1209
        %1212 = vst [vmem:[#allocation2 + $0x68] sm:$0xf] %v1210
        %1213 = vrot.lane.b32.xlu0 %v984, 113
        %v1214 = vpop.permute.xlu0 %1213
        %1215 = vrot.lane.b32.xlu0 %v1004, 113
        %v1216 = vpop.permute.xlu0 %1215
        %v1217 = vsel %vm1204, %v1214, %v1216
        %v1218 = vsel %vm1204, %v1216, %v1214
        %v1219 = vmul.f32 %v1217, %v1207
        %v1220 = vmul.f32 %v1218, %v1208
        %v1223 = vrot.slane %v1219, 4
        %v1224 = vrot.slane %v1220, 4
        %1227 = vst [vmem:[#allocation2 + $0x60] sm:$0xf0] %v1223
        %1228 = vst [vmem:[#allocation2 + $0x68] sm:$0xf0] %v1224
        %1229 = vst [vmem:[#allocation1] ss:$2 sm:$0xff] %v357
        %v1230 = vld.sshfl [vmem:[#allocation1] sm:$0xff pattern:$0x75316420]
        %v1231 = vld.sshfl [vmem:[#allocation1 + $0x8] sm:$0xff pattern:$0x75316420]
        %1234 = vrot.lane.b32.xlu0 %v1230, 112
        %v1235 = vpop.permute.xlu0 %1234
        %1236 = vrot.lane.b32.xlu0 %v1231, 112
        %v1237 = vpop.permute.xlu0 %1236
        %vm1238 = vcmp.lt.s32.totalorder %v944, 112
        %v1239 = vsel %vm1238, %v1235, %v1237
        %v1240 = vsel %vm1238, %v1237, %v1235
        %v1241 = vperm.slane %v1006, 7
        %v1242 = vperm.slane %v1007, 7
        %v1243 = vmul.f32 %v1239, %v1241
        %v1244 = vmul.f32 %v1240, %v1242
        %1245 = vst [vmem:[#allocation2 + $0x70] sm:$0xf] %v1243
        %1246 = vst [vmem:[#allocation2 + $0x78] sm:$0xf] %v1244
        %1247 = vrot.lane.b32.xlu0 %v984, 112
        %v1248 = vpop.permute.xlu0 %1247
        %1249 = vrot.lane.b32.xlu0 %v1004, 112
        %v1250 = vpop.permute.xlu0 %1249
        %v1251 = vsel %vm1238, %v1248, %v1250
        %v1252 = vsel %vm1238, %v1250, %v1248
        %v1253 = vmul.f32 %v1251, %v1241
        %v1254 = vmul.f32 %v1252, %v1242
        %v1257 = vrot.slane %v1253, 4
        %v1258 = vrot.slane %v1254, 4
        %1261 = vst [vmem:[#allocation2 + $0x70] sm:$0xf0] %v1257
        %1262 = vst [vmem:[#allocation2 + $0x78] sm:$0xf0] %v1258
        %1263 = vst [vmem:[#allocation1] ss:$2 sm:$0xff] %v357
        %v1264 = vld.sshfl [vmem:[#allocation1] sm:$0xff pattern:$0x75316420]
        %v1265 = vld.sshfl [vmem:[#allocation1 + $0x8] sm:$0xff pattern:$0x75316420]
        %1268 = vrot.lane.b32.xlu0 %v1264, 111
        %v1269 = vpop.permute.xlu0 %1268
        %1270 = vrot.lane.b32.xlu0 %v1265, 111
        %v1271 = vpop.permute.xlu0 %1270
        %vm1272 = vcmp.lt.s32.totalorder %v944, 111
        %v1273 = vsel %vm1272, %v1269, %v1271
        %v1274 = vsel %vm1272, %v1271, %v1269
        %v1275 = vperm.slane %v1008, 0
        %v1276 = vperm.slane %v1009, 0
        %v1277 = vmul.f32 %v1273, %v1275
        %v1278 = vmul.f32 %v1274, %v1276
        %1279 = vst [vmem:[#allocation2 + $0x80] sm:$0xf] %v1277
        %1280 = vst [vmem:[#allocation2 + $0x88] sm:$0xf] %v1278
        %1281 = vrot.lane.b32.xlu0 %v984, 111
        %v1282 = vpop.permute.xlu0 %1281
        %1283 = vrot.lane.b32.xlu0 %v1004, 111
        %v1284 = vpop.permute.xlu0 %1283
        %v1285 = vsel %vm1272, %v1282, %v1284
        %v1286 = vsel %vm1272, %v1284, %v1282
        %v1287 = vmul.f32 %v1285, %v1275
        %v1288 = vmul.f32 %v1286, %v1276
        %v1291 = vrot.slane %v1287, 4
        %v1292 = vrot.slane %v1288, 4
        %1295 = vst [vmem:[#allocation2 + $0x80] sm:$0xf0] %v1291
        %1296 = vst [vmem:[#allocation2 + $0x88] sm:$0xf0] %v1292
        %v1297 = vld [vmem:[#allocation9] sm:$0xff]
        %v1298 = vld [vmem:[#allocation9 + $0x8] sm:$0xff]
        %v1299 = vld [vmem:[#allocation2] sm:$0xff]
        %v1300 = vld [vmem:[#allocation2 + $0x8] sm:$0xff]
        %v1301 = vld [vmem:[#allocation2 + $0x10] sm:$0xff]
        %v1302 = vld [vmem:[#allocation2 + $0x18] sm:$0xff]
        %v1303 = vld [vmem:[#allocation2 + $0x20] sm:$0xff]
        %v1304 = vld [vmem:[#allocation2 + $0x28] sm:$0xff]
        %v1305 = vld [vmem:[#allocation2 + $0x30] sm:$0xff]
        %v1306 = vld [vmem:[#allocation2 + $0x38] sm:$0xff]
        %v1307 = vld [vmem:[#allocation2 + $0x40] sm:$0xff]
        %v1308 = vld [vmem:[#allocation2 + $0x48] sm:$0xff]
        %v1309 = vld [vmem:[#allocation2 + $0x50] sm:$0xff]
        %v1310 = vld [vmem:[#allocation2 + $0x58] sm:$0xff]
        %v1311 = vld [vmem:[#allocation2 + $0x60] sm:$0xff]
        %v1312 = vld [vmem:[#allocation2 + $0x68] sm:$0xff]
        %v1313 = vld [vmem:[#allocation2 + $0x70] sm:$0xff]
        %v1314 = vld [vmem:[#allocation2 + $0x78] sm:$0xff]
        %v1315 = vld [vmem:[#allocation2 + $0x80] sm:$0xff]
        %v1316 = vld [vmem:[#allocation2 + $0x88] sm:$0xff]
        %vm1317 = vcmask 588800
        %v1319 = vsel %vm1317, %v1297, 0
        %v1322 = vsel %vm1317, %v1298, 0
        %1324 = vmatpush.msra.mxu0 0.0
        %1325 = vmatpush.msra.mxu0 0.0
        %1326 = vmatpush.msra.mxu0 0.0
        %1327 = vmatpush.msra.mxu0 0.0
        %1328 = vmatpush.msra.mxu0 0.0
        %1329 = vmatpush.msra.mxu0 0.0
        %1330 = vmatpush.msra.mxu0 0.0
        %1331 = vmatpush.msra.mxu0 %v1315
        %1332 = vmatpush.msra.mxu0 %v1313
        %1333 = vmatpush.msra.mxu0 %v1311
        %1334 = vmatpush.msra.mxu0 %v1309
        %1335 = vmatpush.msra.mxu0 %v1307
        %1336 = vmatpush.msra.mxu0 %v1305
        %1337 = vmatpush.msra.mxu0 %v1303
        %1338 = vmatpush.msra.mxu0 %v1301
        %1339 = vmatpush.msra.mxu0 %v1299
        %1340 = vmatmul.f32.gmra.mxu0 %v1319
        %v1341 = vpop.f32.mrf.mxu0
        %v1342 = vadd.f32 0.0, %v1341
        %1343 = vmatmul.f32.gmra.mxu0 %v1322
        %v1344 = vpop.f32.mrf.mxu0
        %v1345 = vadd.f32 0.0, %v1344
        %1346 = vdwg.mxu0
        %1347 = vmatpush.msra.mxu0 0.0
        %1348 = vmatpush.msra.mxu0 0.0
        %1349 = vmatpush.msra.mxu0 0.0
        %1350 = vmatpush.msra.mxu0 0.0
        %1351 = vmatpush.msra.mxu0 0.0
        %1352 = vmatpush.msra.mxu0 0.0
        %1353 = vmatpush.msra.mxu0 0.0
        %1354 = vmatpush.msra.mxu0 %v1316
        %1355 = vmatpush.msra.mxu0 %v1314
        %1356 = vmatpush.msra.mxu0 %v1312
        %1357 = vmatpush.msra.mxu0 %v1310
        %1358 = vmatpush.msra.mxu0 %v1308
        %1359 = vmatpush.msra.mxu0 %v1306
        %1360 = vmatpush.msra.mxu0 %v1304
        %1361 = vmatpush.msra.mxu0 %v1302
        %1362 = vmatpush.msra.mxu0 %v1300
        %1363 = vmatmul.f32.gmra.mxu0 %v1319
        %v1364 = vpop.f32.mrf.mxu0
        %v1365 = vadd.f32 0.0, %v1364
        %1366 = vmatmul.f32.gmra.mxu0 %v1322
        %v1367 = vpop.f32.mrf.mxu0
        %v1368 = vadd.f32 0.0, %v1367
        %1369 = vdwg.mxu0
        %v1370 = vld [vmem:[#allocation11] sm:$0xff]
        %v1371 = vld [vmem:[#allocation11 + $0x8] sm:$0xff]
        %v1372 = vadd.f32 %v1345, %v1370
        %v1373 = vadd.f32 %v1368, %v1371
        %v1374 = vmul.f32 %v1372, 0.5
        %v1375 = vmul.f32 %v1373, 0.5
        %v1376 = vtanh.pop %v1374
        %v1377 = vtanh.pop %v1375
        %v1378 = vmul.f32 %v1376, 0.5
        %v1379 = vmul.f32 %v1377, 0.5
        %v1380 = vadd.f32 %v1378, 0.5
        %v1381 = vadd.f32 %v1379, 0.5
        %v1382 = vmul.f32 %v1342, %v1380
        %v1383 = vmul.f32 %v1365, %v1381
        %1384 = vrot.lane.b32.xlu0 %v1382, 17
        %v1385 = vpop.permute.xlu0 %1384
        %1386 = vrot.lane.b32.xlu0 %v1383, 17
        %v1387 = vpop.permute.xlu0 %1386
        %v1388 = vsel %vm1019, %v1385, %v1387
        %v1389 = vsel %vm1019, %v1387, %v1385
        %v1390 = vmul.f32 %v1389, %v1022
        %v1391 = vmul.f32 %v1388, %v1023
        %1392 = vst [vmem:[#allocation2] sm:$0xff] %v1390
        %1393 = vst [vmem:[#allocation2 + $0x8] sm:$0xff] %v1391
        %1394 = vrot.lane.b32.xlu0 %v1382, 16
        %v1395 = vpop.permute.xlu0 %1394
        %1396 = vrot.lane.b32.xlu0 %v1383, 16
        %v1397 = vpop.permute.xlu0 %1396
        %v1398 = vsel %vm1053, %v1395, %v1397
        %v1399 = vsel %vm1053, %v1397, %v1395
        %v1400 = vmul.f32 %v1399, %v1056
        %v1401 = vmul.f32 %v1398, %v1057
        %1402 = vst [vmem:[#allocation2 + $0x10] sm:$0xff] %v1400
        %1403 = vst [vmem:[#allocation2 + $0x18] sm:$0xff] %v1401
        %1404 = vrot.lane.b32.xlu0 %v1382, 15
        %v1405 = vpop.permute.xlu0 %1404
        %1406 = vrot.lane.b32.xlu0 %v1383, 15
        %v1407 = vpop.permute.xlu0 %1406
        %v1408 = vsel %vm1087, %v1405, %v1407
        %v1409 = vsel %vm1087, %v1407, %v1405
        %v1410 = vmul.f32 %v1409, %v1090
        %v1411 = vmul.f32 %v1408, %v1091
        %1412 = vst [vmem:[#allocation2 + $0x20] sm:$0xff] %v1410
        %1413 = vst [vmem:[#allocation2 + $0x28] sm:$0xff] %v1411
        %1414 = vrot.lane.b32.xlu0 %v1382, 1
        %v1415 = vpop.permute.xlu0 %1414
        %1416 = vrot.lane.b32.xlu0 %v1383, 1
        %v1417 = vpop.permute.xlu0 %1416
        %v1418 = vsel %vm1121, %v1415, %v1417
        %v1419 = vsel %vm1121, %v1417, %v1415
        %v1420 = vmul.f32 %v1419, %v1124
        %v1421 = vmul.f32 %v1418, %v1125
        %1422 = vst [vmem:[#allocation2 + $0x30] sm:$0xff] %v1420
        %1423 = vst [vmem:[#allocation2 + $0x38] sm:$0xff] %v1421
        %1424 = vst [vmem:[#allocation2 + $0x40] sm:$0xff] %v1382
        %1425 = vst [vmem:[#allocation2 + $0x48] sm:$0xff] %v1383
        %1426 = vrot.lane.b32.xlu0 %v1382, 127
        %v1427 = vpop.permute.xlu0 %1426
        %1428 = vrot.lane.b32.xlu0 %v1383, 127
        %v1429 = vpop.permute.xlu0 %1428
        %v1430 = vsel %vm1170, %v1427, %v1429
        %v1431 = vsel %vm1170, %v1429, %v1427
        %v1432 = vmul.f32 %v1430, %v1173
        %v1433 = vmul.f32 %v1431, %v1174
        %1434 = vst [vmem:[#allocation2 + $0x50] sm:$0xff] %v1432
        %1435 = vst [vmem:[#allocation2 + $0x58] sm:$0xff] %v1433
        %1436 = vrot.lane.b32.xlu0 %v1382, 113
        %v1437 = vpop.permute.xlu0 %1436
        %1438 = vrot.lane.b32.xlu0 %v1383, 113
        %v1439 = vpop.permute.xlu0 %1438
        %v1440 = vsel %vm1204, %v1437, %v1439
        %v1441 = vsel %vm1204, %v1439, %v1437
        %v1442 = vmul.f32 %v1440, %v1207
        %v1443 = vmul.f32 %v1441, %v1208
        %1444 = vst [vmem:[#allocation2 + $0x60] sm:$0xff] %v1442
        %1445 = vst [vmem:[#allocation2 + $0x68] sm:$0xff] %v1443
        %1446 = vrot.lane.b32.xlu0 %v1382, 112
        %v1447 = vpop.permute.xlu0 %1446
        %1448 = vrot.lane.b32.xlu0 %v1383, 112
        %v1449 = vpop.permute.xlu0 %1448
        %v1450 = vsel %vm1238, %v1447, %v1449
        %v1451 = vsel %vm1238, %v1449, %v1447
        %v1452 = vmul.f32 %v1450, %v1241
        %v1453 = vmul.f32 %v1451, %v1242
        %1454 = vst [vmem:[#allocation2 + $0x70] sm:$0xff] %v1452
        %1455 = vst [vmem:[#allocation2 + $0x78] sm:$0xff] %v1453
        %1456 = vrot.lane.b32.xlu0 %v1382, 111
        %v1457 = vpop.permute.xlu0 %1456
        %1458 = vrot.lane.b32.xlu0 %v1383, 111
        %v1459 = vpop.permute.xlu0 %1458
        %v1460 = vsel %vm1272, %v1457, %v1459
        %v1461 = vsel %vm1272, %v1459, %v1457
        %v1462 = vmul.f32 %v1460, %v1275
        %v1463 = vmul.f32 %v1461, %v1276
        %1464 = vst [vmem:[#allocation2 + $0x80] sm:$0xff] %v1462
        %1465 = vst [vmem:[#allocation2 + $0x88] sm:$0xff] %v1463
        %v1466 = vld [vmem:[%s5] sm:$0xf]
        %v1467 = vld [vmem:[#allocation2] sm:$0xff]
        %v1468 = vld [vmem:[#allocation2 + $0x8] sm:$0xff]
        %v1469 = vld [vmem:[#allocation2 + $0x10] sm:$0xff]
        %v1470 = vld [vmem:[#allocation2 + $0x18] sm:$0xff]
        %v1471 = vld [vmem:[#allocation2 + $0x20] sm:$0xff]
        %v1472 = vld [vmem:[#allocation2 + $0x28] sm:$0xff]
        %v1473 = vld [vmem:[#allocation2 + $0x30] sm:$0xff]
        %v1474 = vld [vmem:[#allocation2 + $0x38] sm:$0xff]
        %v1475 = vld [vmem:[#allocation2 + $0x40] sm:$0xff]
        %v1476 = vld [vmem:[#allocation2 + $0x48] sm:$0xff]
        %v1477 = vld [vmem:[#allocation2 + $0x50] sm:$0xff]
        %v1478 = vld [vmem:[#allocation2 + $0x58] sm:$0xff]
        %v1479 = vld [vmem:[#allocation2 + $0x60] sm:$0xff]
        %v1480 = vld [vmem:[#allocation2 + $0x68] sm:$0xff]
        %v1481 = vld [vmem:[#allocation2 + $0x70] sm:$0xff]
        %v1482 = vld [vmem:[#allocation2 + $0x78] sm:$0xff]
        %v1483 = vld [vmem:[#allocation2 + $0x80] sm:$0xff]
        %v1484 = vld [vmem:[#allocation2 + $0x88] sm:$0xff]
        %v1486 = vsel %vm1317, %v1466, 0
        %1488 = vmatpush.msra.mxu0 0.0
        %1489 = vmatpush.msra.mxu0 0.0
        %1490 = vmatpush.msra.mxu0 0.0
        %1491 = vmatpush.msra.mxu0 0.0
        %1492 = vmatpush.msra.mxu0 0.0
        %1493 = vmatpush.msra.mxu0 0.0
        %1494 = vmatpush.msra.mxu0 0.0
        %1495 = vmatpush.msra.mxu0 %v1483
        %1496 = vmatpush.msra.mxu0 %v1481
        %1497 = vmatpush.msra.mxu0 %v1479
        %1498 = vmatpush.msra.mxu0 %v1477
        %1499 = vmatpush.msra.mxu0 %v1475
        %1500 = vmatpush.msra.mxu0 %v1473
        %1501 = vmatpush.msra.mxu0 %v1471
        %1502 = vmatpush.msra.mxu0 %v1469
        %1503 = vmatpush.msra.mxu0 %v1467
        %1504 = vmatmul.f32.gmra.mxu0 %v1486
        %v1505 = vpop.f32.mrf.mxu0
        %v1506 = vadd.f32 0.0, %v1505
        %1507 = vdwg.mxu0
        %1508 = vmatpush.msra.mxu0 0.0
        %1509 = vmatpush.msra.mxu0 0.0
        %1510 = vmatpush.msra.mxu0 0.0
        %1511 = vmatpush.msra.mxu0 0.0
        %1512 = vmatpush.msra.mxu0 0.0
        %1513 = vmatpush.msra.mxu0 0.0
        %1514 = vmatpush.msra.mxu0 0.0
        %1515 = vmatpush.msra.mxu0 %v1484
        %1516 = vmatpush.msra.mxu0 %v1482
        %1517 = vmatpush.msra.mxu0 %v1480
        %1518 = vmatpush.msra.mxu0 %v1478
        %1519 = vmatpush.msra.mxu0 %v1476
        %1520 = vmatpush.msra.mxu0 %v1474
        %1521 = vmatpush.msra.mxu0 %v1472
        %1522 = vmatpush.msra.mxu0 %v1470
        %1523 = vmatpush.msra.mxu0 %v1468
        %1524 = vmatmul.f32.gmra.mxu0 %v1486
        %v1525 = vpop.f32.mrf.mxu0
        %v1526 = vadd.f32 0.0, %v1525
        %1527 = vdwg.mxu0
        %v1530 = vrot.slane %v1526, 4
        %v1531 = vsel %vm961, %v1506, %v1530
        %1533 = vst [vmem:[%s356] sm:$0xff] %v1531
        %s1534 = sand.u32 %s171, 1
        %s1535 = scalar_lea.sflag [#allocation5], %s1534
        %s1536 = sand.u32 %s171, 1
        %s1537 = smul.addr %s1536, 8
        %s1538 = scalar_lea.vmem [#allocation12], %s1537
        // Predicated region
        $region65: #{tpu_custom_call.1} parent=43 // pred_check
          %p1539 = pneg %p181
        $region66: #{tpu_custom_call.1} parent=43 // pred_check_branch
          %1541 = sbr.rel (%p1539) target = $region68
        $region67: #{tpu_custom_call.1} parent=43 // pred_region
          %1543 = vsyncadd %s1535, 0
          %s1544 = smul.addr %s27, 2
          %s1545 = smul.addr %s1544, 4
          %s1546 = scalar_lea.hbm %s6, %s1545
          %s1548 = sshll.u32 %s1538, 4
          %s1549 = int_to_ptr.vmem [resolvable:$true] %s1548
          %s1550 = sshll.u32 %s1546, 4
          %s1551 = int_to_ptr.hbm [resolvable:$true] %s1550
          %1553 = dma.vmem_to_hbm [thread:$0]  %s1549, 128, %s1551, %s1535
        $region68: #{tpu_custom_call.1} parent=43 // pred_fallthru
          _
      $region44: #{tpu_custom_call.1} parent=5 // pred_fallthru
        _
      %p1554 = scmp.le.s32.totalorder 2, %s22
      // Predicated region
      $region69: #{tpu_custom_call.1} parent=5 // pred_check
        %p1555 = pneg %p1554
      $region70: #{tpu_custom_call.1} parent=5 // pred_check_branch
        %1557 = sbr.rel (%p1555) target = $region72
      $region71: #{tpu_custom_call.1} parent=5 // pred_region
        %s1558 = ssub.s32 %s22, 2
        // Predicated region
        $region73: #{tpu_custom_call.1} parent=71 // pred_check
          %p1559 = pneg %p187
        $region74: #{tpu_custom_call.1} parent=71 // pred_check_branch
          %1561 = sbr.rel (%p1559) target = $region76
        $region75: #{tpu_custom_call.1} parent=71 // pred_region
          %s1562 = sand.u32 %s172, 1
          %s1563 = scalar_lea.sflag [#allocation5], %s1562
          %s1564 = sand.u32 %s172, 1
          %s1565 = smul.addr %s1564, 8
          %s1566 = scalar_lea.vmem [#allocation12], %s1565
          %1568 = dma.done %s1563, 128
        $region76: #{tpu_custom_call.1} parent=71 // pred_fallthru
          _
      $region72: #{tpu_custom_call.1} parent=5 // pred_fallthru
        _
    $region6: #{tpu_custom_call.1} parent=1 // loop_footer
      %s26 = sadd.s32 1, %s22
    $region7: #{tpu_custom_call.1} parent=1 // loop_footer_branch
      %21 = sbr.rel target = $region3
    $region8: #{tpu_custom_call.1} parent=1 // loop_exit
      _
    %1569 = vsyncpa [#allocation4], 1
    %s1570 = scalar_lea.sflag [#allocation4], 1
    %1571 = vsyncpa %s1570, 1
    %1572 = vsyncpa [#allocation7], 1
    %s1573 = scalar_lea.sflag [#allocation7], 1
    %1574 = vsyncpa %s1573, 1
    %1575 = vsyncpa [#allocation10], 1
    %1576 = vsyncpa [#allocation5], 1
    %s1577 = scalar_lea.sflag [#allocation5], 1
    %1578 = vsyncpa %s1577, 1

</llo_original>
